<compile_context>
chip_gen: v6e
topology: v6e:2x2x1
jax: 0.10.0
libtpu: 0.0.40
codegen_flags: <defaults>
</compile_context>

<pallas_src>
import jax
import jax.numpy as jnp
from jax.experimental import pallas as pl
from jax.experimental.pallas import tpu as pltpu

H1, H2 = 400, 300      # logical hidden sizes (PyTorch module)
H1P, H2P = 512, 384    # lane-padded hidden sizes (multiples of 128)


def _round_up(x, m):
    return (x + m - 1) // m * m


def _pick_tb(B):
    """Batch tile: single tile for tiny batches, >=2 tiles once B >= 32 (so the
    'parallel' grid axis can shard across v7x's two TensorCores), capped at 512."""
    if B < 32:
        return _round_up(max(B, 8), 8)
    return min(512, _round_up((B + 1) // 2, 16))


# ----------------------------------------------------------------------------
# Kernel
# ----------------------------------------------------------------------------
def critic_kernel(xu_ref, w14_ref, w2_ref, w5_ref, w3_ref, w6_ref, q_ref):
    xu = xu_ref[...]                                         # bf16 [TB, IN_PAD]

    # Fused layer 1 for both heads: one wide MXU matmul. Biases (b1/b4) are folded
    # into the ones-lane of xu, so the epilogue is just cast + ReLU (bf16 vregs).
    h = jnp.dot(xu, w14_ref[...], preferred_element_type=jnp.float32)
    h = jnp.maximum(h.astype(jnp.bfloat16), 0)               # bf16 [TB, 2*H1P]
    h1 = h[:, :H1P]                                          # lane-boundary slices
    h2 = h[:, H1P:]

    # Layer 2 (per head): bf16 MXU, f32 accumulation. b2/b5 folded via ones column.
    g1 = jnp.maximum(jnp.dot(h1, w2_ref[...], preferred_element_type=jnp.float32), 0.0)
    g2 = jnp.maximum(jnp.dot(h2, w5_ref[...], preferred_element_type=jnp.float32), 0.0)

    # Layer 3: N=1 projection as VPU multiply + XLU lane reduce (no 1-column MXU
    # matmul). b3/b6 folded via the ones column of g1/g2. Direct column stores,
    # no in-kernel concatenate.
    q_ref[:, 0:1] = jnp.sum(g1 * w3_ref[...], axis=-1, keepdims=True)
    q_ref[:, 1:2] = jnp.sum(g2 * w6_ref[...], axis=-1, keepdims=True)


# ----------------------------------------------------------------------------
# Parameter init & one-time prep (padding / bias folding / bf16 cast)
# ----------------------------------------------------------------------------
def init_critic_params(key, state_dim, action_dim):
    """Deterministic init mimicking PyTorch Linear default (uniform +-1/sqrt(fan_in))."""
    in_dim = state_dim + action_dim
    sizes = [(in_dim, H1), (H1, H2), (H2, 1),     # Q1 head: layer_1..3
             (in_dim, H1), (H1, H2), (H2, 1)]     # Q2 head: layer_4..6
    params = []
    for (fi, fo) in sizes:
        key, kw, kb = jax.random.split(key, 3)
        bound = 1.0 / jnp.sqrt(jnp.float32(fi))
        w = jax.random.uniform(kw, (fi, fo), jnp.float32, -bound, bound)
        b = jax.random.uniform(kb, (1, fo), jnp.float32, -bound, bound)
        params += [w, b]
    return tuple(params)


def prepare_critic_params(params, state_dim, action_dim):
    """One-time prep: pad to lane multiples, fold biases into weights, cast to bf16.
    Call once at init; the forward pass only streams xu."""
    (w1, b1, w2, b2, w3, b3, w4, b4, w5, b5, w6, b6) = params
    in_dim = state_dim + action_dim
    in_pad = _round_up(in_dim + 1, 128)            # +1 ones-lane for folded b1/b4
    f32 = jnp.float32

    # Fused layer-1 weight, both heads side by side [in_pad, 2*H1P].
    # Row `in_dim` (multiplied by the ones-lane of xu) carries b1/b4 and a 1.0 that
    # seeds the layer-2 bias column (index H1 within each head's half).
    w14 = jnp.zeros((in_pad, 2 * H1P), f32)
    w14 = w14.at[:in_dim, :H1].set(w1).at[in_dim, :H1].set(b1[0])
    w14 = w14.at[:in_dim, H1P:H1P + H1].set(w4).at[in_dim, H1P:H1P + H1].set(b4[0])
    w14 = w14.at[in_dim, H1].set(1.0).at[in_dim, H1P + H1].set(1.0)

    def mid(w, b):
        wp = jnp.zeros((H1P, H2P), f32)
        wp = wp.at[:H1, :H2].set(w)                # weights
        wp = wp.at[H1, :H2].set(b[0])              # bias row (hits the ones column)
        wp = wp.at[H1, H2].set(1.0)                # seeds the layer-3 bias column
        return wp.astype(jnp.bfloat16)

    def last(w, b):
        r = jnp.zeros((1, H2P), f32)
        return r.at[:, :H2].set(w[:, 0]).at[0, H2].set(b[0, 0])

    return (w14.astype(jnp.bfloat16), mid(w2, b2), mid(w5, b5),
            last(w3, b3), last(w6, b6))


# ----------------------------------------------------------------------------
# Forward wrapper
# ----------------------------------------------------------------------------
def critic_forward(x, u, prepped):
    w14, w2p, w5p, w3r, w6r = prepped
    IN_PAD = w14.shape[0]

    xu = jnp.concatenate([x, u], axis=1).astype(jnp.bfloat16)
    B, IN = xu.shape

    TB = _pick_tb(B)
    B_pad = _round_up(B, TB)

    # Build the padded input directly in bf16 (single pad, no f32 round-trip).
    # Column IN is the constant-1 "bias lane"; remaining padded lanes are zero.
    ones = jnp.ones((B, 1), jnp.bfloat16)
    xu_p = jnp.pad(jnp.concatenate([xu, ones], axis=1),
                   ((0, B_pad - B), (0, IN_PAD - IN - 1)))

    def resident(shape):
        return pl.BlockSpec(shape, lambda i: (0, 0))

    # Advisory cost estimate on logical (unpadded) dims.
    flops = 2 * B * (IN * H1 + H1 * H2 + H2) * 2
    bytes_accessed = (B * IN * 2
                      + (w14.size + w2p.size + w5p.size) * 2
                      + (w3r.size + w6r.size) * 4
                      + B * 2 * 4)

    q = pl.pallas_call(
        critic_kernel,
        out_shape=jax.ShapeDtypeStruct((B_pad, 2), jnp.float32),
        grid=(B_pad // TB,),
        in_specs=[
            pl.BlockSpec((TB, IN_PAD), lambda i: (i, 0)),   # xu, tiled over batch
            resident((IN_PAD, 2 * H1P)),                    # fused W1||W4 (+biases)
            resident((H1P, H2P)),                           # W2 (+b2, ones col)
            resident((H1P, H2P)),                           # W5 (+b5, ones col)
            resident((1, H2P)),                             # w3 row (+b3)
            resident((1, H2P)),                             # w6 row (+b6)
        ],
        out_specs=pl.BlockSpec((TB, 2), lambda i: (i, 0)),
        compiler_params=pltpu.CompilerParams(
            dimension_semantics=("parallel",)),
        cost_estimate=pl.CostEstimate(flops=flops,
                                      transcendentals=0,
                                      bytes_accessed=bytes_accessed),
    )(xu_p, w14, w2p, w5p, w3r, w6r)

    q = q[:B]
    return q[:, 0:1], q[:, 1:2]


def critic_forward_ref(x, u, params):
    """Pure-JAX f32 reference of Critic.forward for verification."""
    xu = jnp.concatenate([x, u], axis=1).astype(jnp.float32)
    (w1, b1, w2, b2, w3, b3, w4, b4, w5, b5, w6, b6) = params
    h1 = jax.nn.relu(xu @ w1 + b1)
    h1 = jax.nn.relu(h1 @ w2 + b2)
    q1 = h1 @ w3 + b3
    h2 = jax.nn.relu(xu @ w4 + b4)
    h2 = jax.nn.relu(h2 @ w5 + b5)
    q2 = h2 @ w6 + b6
    return q1, q2


if __name__ == "__main__":
    state_dim, action_dim, batch = 17, 6, 8

    key = jax.random.PRNGKey(0)
    kx, ku, kp = jax.random.split(key, 3)
    x = jax.random.normal(kx, (batch, state_dim), jnp.float32)
    u = jax.random.normal(ku, (batch, action_dim), jnp.float32)

    params = init_critic_params(kp, state_dim, action_dim)
    prepped = prepare_critic_params(params, state_dim, action_dim)   # one-time prep

    q1, q2 = jax.jit(critic_forward)(x, u, prepped)
    q1 = jax.block_until_ready(q1)
    q2 = jax.block_until_ready(q2)

    q1_ref, q2_ref = critic_forward_ref(x, u, params)
    assert q1.shape == (batch, 1) and q2.shape == (batch, 1)
    # bf16 MXU operands / bf16 hidden activations (f32 accumulation) -> loosened
    # tolerance vs the f32 reference.
    assert jnp.allclose(q1, q1_ref, atol=5e-2, rtol=5e-2)
    assert jnp.allclose(q2, q2_ref, atol=5e-2, rtol=5e-2)

    print("KERNEL_OK")
</pallas_src>

<mosaic_0001>
module attributes {stable_mosaic.version = 11 : i64} {
  func.func @critic_kernel(%arg0: i32, %arg1: memref<8x128xbf16, #tpu.memory_space<vmem>>, %arg2: memref<128x1024xbf16, #tpu.memory_space<vmem>>, %arg3: memref<512x384xbf16, #tpu.memory_space<vmem>>, %arg4: memref<512x384xbf16, #tpu.memory_space<vmem>>, %arg5: memref<1x384xf32, #tpu.memory_space<vmem>>, %arg6: memref<1x384xf32, #tpu.memory_space<vmem>>, %arg7: memref<8x2xf32, #tpu.memory_space<vmem>>) attributes {dimension_semantics = [#tpu.dimension_semantics<parallel>], iteration_bounds = array<i64: 1>, scalar_prefetch = 0 : i64, scratch_operands = 0 : i64, tpu.core_type = #tpu.core_type<tc>, window_params = [{transform_indices = @transform_0, window_bounds = array<i64: 8, 128>}, {pipeline_mode = #tpu.pipeline_mode<synchronous>, transform_indices = @transform_1, window_bounds = array<i64: 128, 1024>}, {pipeline_mode = #tpu.pipeline_mode<synchronous>, transform_indices = @transform_2, window_bounds = array<i64: 512, 384>}, {pipeline_mode = #tpu.pipeline_mode<synchronous>, transform_indices = @transform_3, window_bounds = array<i64: 512, 384>}, {pipeline_mode = #tpu.pipeline_mode<synchronous>, transform_indices = @transform_4, window_bounds = array<i64: 1, 384>}, {pipeline_mode = #tpu.pipeline_mode<synchronous>, transform_indices = @transform_5, window_bounds = array<i64: 1, 384>}, {transform_indices = @transform_6, window_bounds = array<i64: 8, 2>}]} {
    %c0 = arith.constant 0 : index
    %c0_0 = arith.constant 0 : index
    %0 = vector.load %arg1[%c0, %c0_0] : memref<8x128xbf16, #tpu.memory_space<vmem>>, vector<8x128xbf16>
    %c0_1 = arith.constant 0 : index
    %c0_2 = arith.constant 0 : index
    %1 = vector.load %arg2[%c0_1, %c0_2] : memref<128x1024xbf16, #tpu.memory_space<vmem>>, vector<128x1024xbf16>
    %cst = arith.constant dense<0.000000e+00> : vector<8x1024xf32>
    %2 = tpu.matmul %0, %1, %cst {dimension_numbers = #tpu.dot_dimension_numbers<[1], [0], [0], [1], [0, 0, 1, 1], [], []>} : vector<8x128xbf16>, vector<128x1024xbf16>, vector<8x1024xf32> -> vector<8x1024xf32>
    %3 = arith.truncf %2 : vector<8x1024xf32> to vector<8x1024xbf16>
    %cst_3 = arith.constant 0.000000e+00 : bf16
    %4 = vector.broadcast %cst_3 : bf16 to vector<8x1024xbf16>
    %5 = arith.maximumf %3, %4 : vector<8x1024xbf16>
    %6 = vector.extract_strided_slice %5 {offsets = [0, 0], sizes = [8, 512], strides = [1, 1]} : vector<8x1024xbf16> to vector<8x512xbf16>
    %7 = vector.extract_strided_slice %5 {offsets = [0, 512], sizes = [8, 512], strides = [1, 1]} : vector<8x1024xbf16> to vector<8x512xbf16>
    %c0_4 = arith.constant 0 : index
    %c0_5 = arith.constant 0 : index
    %8 = vector.load %arg3[%c0_4, %c0_5] : memref<512x384xbf16, #tpu.memory_space<vmem>>, vector<512x384xbf16>
    %cst_6 = arith.constant dense<0.000000e+00> : vector<8x384xf32>
    %9 = tpu.matmul %6, %8, %cst_6 {dimension_numbers = #tpu.dot_dimension_numbers<[1], [0], [0], [1], [0, 0, 1, 1], [], []>} : vector<8x512xbf16>, vector<512x384xbf16>, vector<8x384xf32> -> vector<8x384xf32>
    %cst_7 = arith.constant 0.000000e+00 : f32
    %10 = vector.broadcast %cst_7 : f32 to vector<8x384xf32>
    %11 = arith.maximumf %9, %10 : vector<8x384xf32>
    %c0_8 = arith.constant 0 : index
    %c0_9 = arith.constant 0 : index
    %12 = vector.load %arg4[%c0_8, %c0_9] : memref<512x384xbf16, #tpu.memory_space<vmem>>, vector<512x384xbf16>
    %cst_10 = arith.constant dense<0.000000e+00> : vector<8x384xf32>
    %13 = tpu.matmul %7, %12, %cst_10 {dimension_numbers = #tpu.dot_dimension_numbers<[1], [0], [0], [1], [0, 0, 1, 1], [], []>} : vector<8x512xbf16>, vector<512x384xbf16>, vector<8x384xf32> -> vector<8x384xf32>
    %cst_11 = arith.constant 0.000000e+00 : f32
    %14 = vector.broadcast %cst_11 : f32 to vector<8x384xf32>
    %15 = arith.maximumf %13, %14 : vector<8x384xf32>
    %c0_12 = arith.constant 0 : index
    %c0_13 = arith.constant 0 : index
    %16 = vector.load %arg5[%c0_12, %c0_13] : memref<1x384xf32, #tpu.memory_space<vmem>>, vector<1x384xf32>
    %17 = vector.broadcast %16 : vector<1x384xf32> to vector<8x384xf32>
    %18 = arith.mulf %11, %17 : vector<8x384xf32>
    %cst_14 = arith.constant dense<0.000000e+00> : vector<8xf32>
    %19 = vector.multi_reduction <add>, %18, %cst_14 [1] : vector<8x384xf32> to vector<8xf32>
    %20 = vector.shape_cast %19 : vector<8xf32> to vector<8x1xf32>
    %c0_15 = arith.constant 0 : index
    %c0_16 = arith.constant 0 : index
    %21 = vector.load %arg7[%c0_15, %c0_16] : memref<8x2xf32, #tpu.memory_space<vmem>>, vector<8x1xf32>
    tpu.vector_store %arg7[%c0_15, %c0_16], %20 {strides = array<i32>} : memref<8x2xf32, #tpu.memory_space<vmem>>, vector<8x1xf32>,
    %c0_17 = arith.constant 0 : index
    %c0_18 = arith.constant 0 : index
    %22 = vector.load %arg6[%c0_17, %c0_18] : memref<1x384xf32, #tpu.memory_space<vmem>>, vector<1x384xf32>
    %23 = vector.broadcast %22 : vector<1x384xf32> to vector<8x384xf32>
    %24 = arith.mulf %15, %23 : vector<8x384xf32>
    %cst_19 = arith.constant dense<0.000000e+00> : vector<8xf32>
    %25 = vector.multi_reduction <add>, %24, %cst_19 [1] : vector<8x384xf32> to vector<8xf32>
    %26 = vector.shape_cast %25 : vector<8xf32> to vector<8x1xf32>
    %c0_20 = arith.constant 0 : index
    %c1 = arith.constant 1 : index
    %27 = vector.load %arg7[%c0_20, %c1] : memref<8x2xf32, #tpu.memory_space<vmem>>, vector<8x1xf32>
    tpu.vector_store %arg7[%c0_20, %c1], %26 {strides = array<i32>} : memref<8x2xf32, #tpu.memory_space<vmem>>, vector<8x1xf32>,
    return
  }
  func.func @transform_0(%arg0: i32) -> (i32, i32) {
    %c0_i32 = arith.constant 0 : i32
    %c0_i32_0 = arith.constant 0 : i32
    return %arg0, %c0_i32 : i32, i32
  }
  func.func @transform_1(%arg0: i32) -> (i32, i32) {
    %c0_i32 = arith.constant 0 : i32
    %c0_i32_0 = arith.constant 0 : i32
    %c0_i32_1 = arith.constant 0 : i32
    return %c0_i32, %c0_i32_0 : i32, i32
  }
  func.func @transform_2(%arg0: i32) -> (i32, i32) {
    %c0_i32 = arith.constant 0 : i32
    %c0_i32_0 = arith.constant 0 : i32
    %c0_i32_1 = arith.constant 0 : i32
    return %c0_i32, %c0_i32_0 : i32, i32
  }
  func.func @transform_3(%arg0: i32) -> (i32, i32) {
    %c0_i32 = arith.constant 0 : i32
    %c0_i32_0 = arith.constant 0 : i32
    %c0_i32_1 = arith.constant 0 : i32
    return %c0_i32, %c0_i32_0 : i32, i32
  }
  func.func @transform_4(%arg0: i32) -> (i32, i32) {
    %c0_i32 = arith.constant 0 : i32
    %c0_i32_0 = arith.constant 0 : i32
    %c0_i32_1 = arith.constant 0 : i32
    return %c0_i32, %c0_i32_0 : i32, i32
  }
  func.func @transform_5(%arg0: i32) -> (i32, i32) {
    %c0_i32 = arith.constant 0 : i32
    %c0_i32_0 = arith.constant 0 : i32
    %c0_i32_1 = arith.constant 0 : i32
    return %c0_i32, %c0_i32_0 : i32, i32
  }
  func.func @transform_6(%arg0: i32) -> (i32, i32) {
    %c0_i32 = arith.constant 0 : i32
    %c0_i32_0 = arith.constant 0 : i32
    return %arg0, %c0_i32 : i32, i32
  }
}

</mosaic_0001>

<llo_original>
// kernel: critic_forward.1
$region0: #{critic_forward.1}
  #allocation0 [shape = 'u32[]', space=smem, size = 0x4, offset = 0x4, fixed_abs, tag = 'smem constant byte address 0x4 - core index']
  #allocation1 [shape = 'u32[144,128]{1,0:T(1,128)}', space=vmem, size = 0x12000, scoped, tag = 'internal scratch']
  %s0 = inlined_call_operand.vmem [shape: bf16[8,128], index: 0, kind: input, shape index: {}]
  %s1 = inlined_call_operand.hbm [shape: bf16[128,1024], index: 1, kind: input, shape index: {}]
  %s2 = inlined_call_operand.hbm [shape: bf16[512,384], index: 2, kind: input, shape index: {}]
  %s3 = inlined_call_operand.hbm [shape: bf16[512,384], index: 3, kind: input, shape index: {}]
  %s4 = inlined_call_operand.vmem [shape: f32[1,384], index: 4, kind: input, shape index: {}]
  %s5 = inlined_call_operand.vmem [shape: f32[1,384], index: 5, kind: input, shape index: {}]
  %s6 = inlined_call_operand.vmem [shape: f32[8,2], index: 6, kind: output, shape index: {}]
  %s7 = sld [smem:[#allocation0]]
  $region46: #{critic_forward.1} parent=0
    _
  %s9 = ssub.s32 1, %s7
  %s10 = scalar_select 0, %s9, %s7
  $region1: #{critic_forward.1} parent=0
    #allocation2 [shape = 'u8[262144]{0}', space=vmem, size = 0x40000, scoped, tag = 'input window, operand 1, single buffered']
    #allocation3 [shape = 's32[1]{0}', space=sflag, size = 0x4, scoped, tag = 'scoped memory for critic_forward.1']
    #allocation4 [shape = 'u8[393216]{0}', space=vmem, size = 0x60000, scoped, tag = 'input window, operand 2, single buffered']
    #allocation5 [shape = 's32[1]{0}', space=sflag, size = 0x4, scoped, tag = 'scoped memory for critic_forward.1']
    #allocation6 [shape = 'u8[393216]{0}', space=vmem, size = 0x60000, scoped, tag = 'input window, operand 3, single buffered']
    %11 = vsyncpa [#allocation3], 0
    %12 = vsyncpa [#allocation5], 0
    // Predicated region
    $region2: #{critic_forward.1} parent=1 // pred_check
      _
    $region3: #{critic_forward.1} parent=1 // pred_check_branch
      %14 = sbr.rel (0) target = $region5
    $region4: #{critic_forward.1} parent=1 // pred_region
      _
    $region5: #{critic_forward.1} parent=1 // pred_fallthru
      _
    // Predicated region
    $region6: #{critic_forward.1} parent=1 // pred_check
      _
    $region7: #{critic_forward.1} parent=1 // pred_check_branch
      %16 = sbr.rel (0) target = $region9
    $region8: #{critic_forward.1} parent=1 // pred_region
      %s18 = ssub.s32 8192, 8192
      %19 = vsyncadd [#allocation3], %s18
      %s20 = sshll.u32 [#allocation2], 4
      %s21 = int_to_ptr.vmem [resolvable:$true] %s20
      %26 = dma.hbm_to_vmem [thread:$0]  %s1, 8192, %s21, [#allocation3], 512, 512, 32
    $region9: #{critic_forward.1} parent=1 // pred_fallthru
      _
    // Predicated region
    $region10: #{critic_forward.1} parent=1 // pred_check
      _
    $region11: #{critic_forward.1} parent=1 // pred_check_branch
      %28 = sbr.rel (0) target = $region13
    $region12: #{critic_forward.1} parent=1 // pred_region
      %s30 = ssub.s32 12288, 12288
      %31 = vsyncadd [#allocation5], %s30
      %s32 = sshll.u32 [#allocation4], 4
      %s33 = int_to_ptr.vmem [resolvable:$true] %s32
      %38 = dma.hbm_to_vmem [thread:$0]  %s2, 12288, %s33, [#allocation5], 192, 192, 12
    $region13: #{critic_forward.1} parent=1 // pred_fallthru
      _
    // Predicated region
    $region14: #{critic_forward.1} parent=1 // pred_check
      _
    $region15: #{critic_forward.1} parent=1 // pred_check_branch
      %40 = sbr.rel (0) target = $region17
    $region16: #{critic_forward.1} parent=1 // pred_region
      %s42 = ssub.s32 12288, 12288
      %43 = vsyncadd [#allocation5], %s42
      %s44 = sshll.u32 [#allocation6], 4
      %s45 = int_to_ptr.vmem [resolvable:$true] %s44
      %50 = dma.hbm_to_vmem [thread:$0]  %s3, 12288, %s45, [#allocation5], 192, 192, 12
    $region17: #{critic_forward.1} parent=1 // pred_fallthru
      _
    // Predicated region
    $region18: #{critic_forward.1} parent=1 // pred_check
      _
    $region19: #{critic_forward.1} parent=1 // pred_check_branch
      %52 = sbr.rel (0) target = $region21
    $region20: #{critic_forward.1} parent=1 // pred_region
      _
    $region21: #{critic_forward.1} parent=1 // pred_fallthru
      _
    // Predicated region
    $region22: #{critic_forward.1} parent=1 // pred_check
      _
    $region23: #{critic_forward.1} parent=1 // pred_check_branch
      %54 = sbr.rel (0) target = $region25
    $region24: #{critic_forward.1} parent=1 // pred_region
      _
    $region25: #{critic_forward.1} parent=1 // pred_fallthru
      _
    // Predicated region
    $region26: #{critic_forward.1} parent=1 // pred_check
      _
    $region27: #{critic_forward.1} parent=1 // pred_check_branch
      %56 = sbr.rel (0) target = $region29
    $region28: #{critic_forward.1} parent=1 // pred_region
      %57 = dma.done [#allocation3], 8192
    $region29: #{critic_forward.1} parent=1 // pred_fallthru
      _
    // Predicated region
    $region30: #{critic_forward.1} parent=1 // pred_check
      _
    $region31: #{critic_forward.1} parent=1 // pred_check_branch
      %59 = sbr.rel (0) target = $region33
    $region32: #{critic_forward.1} parent=1 // pred_region
      %60 = dma.done [#allocation5], 12288
    $region33: #{critic_forward.1} parent=1 // pred_fallthru
      _
    // Predicated region
    $region34: #{critic_forward.1} parent=1 // pred_check
      _
    $region35: #{critic_forward.1} parent=1 // pred_check_branch
      %62 = sbr.rel (0) target = $region37
    $region36: #{critic_forward.1} parent=1 // pred_region
      %63 = dma.done [#allocation5], 12288
    $region37: #{critic_forward.1} parent=1 // pred_fallthru
      _
    %v65 = vld [vmem:[%s0] sm:$0xf]
    %v66 = vld [vmem:[#allocation2] sm:$0xff]
    %v67 = vld [vmem:[#allocation2 + $0x8] sm:$0xff]
    %v68 = vld [vmem:[#allocation2 + $0x10] sm:$0xff]
    %v69 = vld [vmem:[#allocation2 + $0x18] sm:$0xff]
    %v70 = vld [vmem:[#allocation2 + $0x20] sm:$0xff]
    %v71 = vld [vmem:[#allocation2 + $0x28] sm:$0xff]
    %v72 = vld [vmem:[#allocation2 + $0x30] sm:$0xff]
    %v73 = vld [vmem:[#allocation2 + $0x38] sm:$0xff]
    %v74 = vld [vmem:[#allocation2 + $0x40] sm:$0xff]
    %v75 = vld [vmem:[#allocation2 + $0x48] sm:$0xff]
    %v76 = vld [vmem:[#allocation2 + $0x50] sm:$0xff]
    %v77 = vld [vmem:[#allocation2 + $0x58] sm:$0xff]
    %v78 = vld [vmem:[#allocation2 + $0x60] sm:$0xff]
    %v79 = vld [vmem:[#allocation2 + $0x68] sm:$0xff]
    %v80 = vld [vmem:[#allocation2 + $0x70] sm:$0xff]
    %v81 = vld [vmem:[#allocation2 + $0x78] sm:$0xff]
    %v82 = vld [vmem:[#allocation2 + $0x80] sm:$0xff]
    %v83 = vld [vmem:[#allocation2 + $0x88] sm:$0xff]
    %v84 = vld [vmem:[#allocation2 + $0x90] sm:$0xff]
    %v85 = vld [vmem:[#allocation2 + $0x98] sm:$0xff]
    %v86 = vld [vmem:[#allocation2 + $0xa0] sm:$0xff]
    %v87 = vld [vmem:[#allocation2 + $0xa8] sm:$0xff]
    %v88 = vld [vmem:[#allocation2 + $0xb0] sm:$0xff]
    %v89 = vld [vmem:[#allocation2 + $0xb8] sm:$0xff]
    %v90 = vld [vmem:[#allocation2 + $0xc0] sm:$0xff]
    %v91 = vld [vmem:[#allocation2 + $0xc8] sm:$0xff]
    %v92 = vld [vmem:[#allocation2 + $0xd0] sm:$0xff]
    %v93 = vld [vmem:[#allocation2 + $0xd8] sm:$0xff]
    %v94 = vld [vmem:[#allocation2 + $0xe0] sm:$0xff]
    %v95 = vld [vmem:[#allocation2 + $0xe8] sm:$0xff]
    %v96 = vld [vmem:[#allocation2 + $0xf0] sm:$0xff]
    %v97 = vld [vmem:[#allocation2 + $0xf8] sm:$0xff]
    %v98 = vld [vmem:[#allocation2 + $0x100] sm:$0xff]
    %v99 = vld [vmem:[#allocation2 + $0x108] sm:$0xff]
    %v100 = vld [vmem:[#allocation2 + $0x110] sm:$0xff]
    %v101 = vld [vmem:[#allocation2 + $0x118] sm:$0xff]
    %v102 = vld [vmem:[#allocation2 + $0x120] sm:$0xff]
    %v103 = vld [vmem:[#allocation2 + $0x128] sm:$0xff]
    %v104 = vld [vmem:[#allocation2 + $0x130] sm:$0xff]
    %v105 = vld [vmem:[#allocation2 + $0x138] sm:$0xff]
    %v106 = vld [vmem:[#allocation2 + $0x140] sm:$0xff]
    %v107 = vld [vmem:[#allocation2 + $0x148] sm:$0xff]
    %v108 = vld [vmem:[#allocation2 + $0x150] sm:$0xff]
    %v109 = vld [vmem:[#allocation2 + $0x158] sm:$0xff]
    %v110 = vld [vmem:[#allocation2 + $0x160] sm:$0xff]
    %v111 = vld [vmem:[#allocation2 + $0x168] sm:$0xff]
    %v112 = vld [vmem:[#allocation2 + $0x170] sm:$0xff]
    %v113 = vld [vmem:[#allocation2 + $0x178] sm:$0xff]
    %v114 = vld [vmem:[#allocation2 + $0x180] sm:$0xff]
    %v115 = vld [vmem:[#allocation2 + $0x188] sm:$0xff]
    %v116 = vld [vmem:[#allocation2 + $0x190] sm:$0xff]
    %v117 = vld [vmem:[#allocation2 + $0x198] sm:$0xff]
    %v118 = vld [vmem:[#allocation2 + $0x1a0] sm:$0xff]
    %v119 = vld [vmem:[#allocation2 + $0x1a8] sm:$0xff]
    %v120 = vld [vmem:[#allocation2 + $0x1b0] sm:$0xff]
    %v121 = vld [vmem:[#allocation2 + $0x1b8] sm:$0xff]
    %v122 = vld [vmem:[#allocation2 + $0x1c0] sm:$0xff]
    %v123 = vld [vmem:[#allocation2 + $0x1c8] sm:$0xff]
    %v124 = vld [vmem:[#allocation2 + $0x1d0] sm:$0xff]
    %v125 = vld [vmem:[#allocation2 + $0x1d8] sm:$0xff]
    %v126 = vld [vmem:[#allocation2 + $0x1e0] sm:$0xff]
    %v127 = vld [vmem:[#allocation2 + $0x1e8] sm:$0xff]
    %v128 = vld [vmem:[#allocation2 + $0x1f0] sm:$0xff]
    %v129 = vld [vmem:[#allocation2 + $0x1f8] sm:$0xff]
    %v194 = vunpack.c.l.b16 %v66
    %v195 = vunpack.c.h.b16 %v66
    %v196 = vunpack.c.l.b16 %v67
    %v197 = vunpack.c.h.b16 %v67
    %v198 = vunpack.c.l.b16 %v68
    %v199 = vunpack.c.h.b16 %v68
    %v200 = vunpack.c.l.b16 %v69
    %v201 = vunpack.c.h.b16 %v69
    %v202 = vunpack.c.l.b16 %v70
    %v203 = vunpack.c.h.b16 %v70
    %v204 = vunpack.c.l.b16 %v71
    %v205 = vunpack.c.h.b16 %v71
    %v206 = vunpack.c.l.b16 %v72
    %v207 = vunpack.c.h.b16 %v72
    %v208 = vunpack.c.l.b16 %v73
    %v209 = vunpack.c.h.b16 %v73
    %v210 = vunpack.c.l.b16 %v74
    %v211 = vunpack.c.h.b16 %v74
    %v212 = vunpack.c.l.b16 %v75
    %v213 = vunpack.c.h.b16 %v75
    %v214 = vunpack.c.l.b16 %v76
    %v215 = vunpack.c.h.b16 %v76
    %v216 = vunpack.c.l.b16 %v77
    %v217 = vunpack.c.h.b16 %v77
    %v218 = vunpack.c.l.b16 %v78
    %v219 = vunpack.c.h.b16 %v78
    %v220 = vunpack.c.l.b16 %v79
    %v221 = vunpack.c.h.b16 %v79
    %v222 = vunpack.c.l.b16 %v80
    %v223 = vunpack.c.h.b16 %v80
    %v224 = vunpack.c.l.b16 %v81
    %v225 = vunpack.c.h.b16 %v81
    %v226 = vunpack.c.l.b16 %v82
    %v227 = vunpack.c.h.b16 %v82
    %v228 = vunpack.c.l.b16 %v83
    %v229 = vunpack.c.h.b16 %v83
    %v230 = vunpack.c.l.b16 %v84
    %v231 = vunpack.c.h.b16 %v84
    %v232 = vunpack.c.l.b16 %v85
    %v233 = vunpack.c.h.b16 %v85
    %v234 = vunpack.c.l.b16 %v86
    %v235 = vunpack.c.h.b16 %v86
    %v236 = vunpack.c.l.b16 %v87
    %v237 = vunpack.c.h.b16 %v87
    %v238 = vunpack.c.l.b16 %v88
    %v239 = vunpack.c.h.b16 %v88
    %v240 = vunpack.c.l.b16 %v89
    %v241 = vunpack.c.h.b16 %v89
    %v242 = vunpack.c.l.b16 %v90
    %v243 = vunpack.c.h.b16 %v90
    %v244 = vunpack.c.l.b16 %v91
    %v245 = vunpack.c.h.b16 %v91
    %v246 = vunpack.c.l.b16 %v92
    %v247 = vunpack.c.h.b16 %v92
    %v248 = vunpack.c.l.b16 %v93
    %v249 = vunpack.c.h.b16 %v93
    %v250 = vunpack.c.l.b16 %v94
    %v251 = vunpack.c.h.b16 %v94
    %v252 = vunpack.c.l.b16 %v95
    %v253 = vunpack.c.h.b16 %v95
    %v254 = vunpack.c.l.b16 %v96
    %v255 = vunpack.c.h.b16 %v96
    %v256 = vunpack.c.l.b16 %v97
    %v257 = vunpack.c.h.b16 %v97
    %v258 = vunpack.c.l.b16 %v98
    %v259 = vunpack.c.h.b16 %v98
    %v260 = vunpack.c.l.b16 %v99
    %v261 = vunpack.c.h.b16 %v99
    %v262 = vunpack.c.l.b16 %v100
    %v263 = vunpack.c.h.b16 %v100
    %v264 = vunpack.c.l.b16 %v101
    %v265 = vunpack.c.h.b16 %v101
    %v266 = vunpack.c.l.b16 %v102
    %v267 = vunpack.c.h.b16 %v102
    %v268 = vunpack.c.l.b16 %v103
    %v269 = vunpack.c.h.b16 %v103
    %v270 = vunpack.c.l.b16 %v104
    %v271 = vunpack.c.h.b16 %v104
    %v272 = vunpack.c.l.b16 %v105
    %v273 = vunpack.c.h.b16 %v105
    %v274 = vunpack.c.l.b16 %v106
    %v275 = vunpack.c.h.b16 %v106
    %v276 = vunpack.c.l.b16 %v107
    %v277 = vunpack.c.h.b16 %v107
    %v278 = vunpack.c.l.b16 %v108
    %v279 = vunpack.c.h.b16 %v108
    %v280 = vunpack.c.l.b16 %v109
    %v281 = vunpack.c.h.b16 %v109
    %v282 = vunpack.c.l.b16 %v110
    %v283 = vunpack.c.h.b16 %v110
    %v284 = vunpack.c.l.b16 %v111
    %v285 = vunpack.c.h.b16 %v111
    %v286 = vunpack.c.l.b16 %v112
    %v287 = vunpack.c.h.b16 %v112
    %v288 = vunpack.c.l.b16 %v113
    %v289 = vunpack.c.h.b16 %v113
    %v290 = vunpack.c.l.b16 %v114
    %v291 = vunpack.c.h.b16 %v114
    %v292 = vunpack.c.l.b16 %v115
    %v293 = vunpack.c.h.b16 %v115
    %v294 = vunpack.c.l.b16 %v116
    %v295 = vunpack.c.h.b16 %v116
    %v296 = vunpack.c.l.b16 %v117
    %v297 = vunpack.c.h.b16 %v117
    %v298 = vunpack.c.l.b16 %v118
    %v299 = vunpack.c.h.b16 %v118
    %v300 = vunpack.c.l.b16 %v119
    %v301 = vunpack.c.h.b16 %v119
    %v302 = vunpack.c.l.b16 %v120
    %v303 = vunpack.c.h.b16 %v120
    %v304 = vunpack.c.l.b16 %v121
    %v305 = vunpack.c.h.b16 %v121
    %v306 = vunpack.c.l.b16 %v122
    %v307 = vunpack.c.h.b16 %v122
    %v308 = vunpack.c.l.b16 %v123
    %v309 = vunpack.c.h.b16 %v123
    %v310 = vunpack.c.l.b16 %v124
    %v311 = vunpack.c.h.b16 %v124
    %v312 = vunpack.c.l.b16 %v125
    %v313 = vunpack.c.h.b16 %v125
    %v314 = vunpack.c.l.b16 %v126
    %v315 = vunpack.c.h.b16 %v126
    %v316 = vunpack.c.l.b16 %v127
    %v317 = vunpack.c.h.b16 %v127
    %v318 = vunpack.c.l.b16 %v128
    %v319 = vunpack.c.h.b16 %v128
    %v320 = vunpack.c.l.b16 %v129
    %v321 = vunpack.c.h.b16 %v129
    %v322 = vpack.c.b16 %v202, %v194
    %v323 = vpack.c.b16 %v203, %v195
    %v324 = vpack.c.b16 %v204, %v196
    %v325 = vpack.c.b16 %v205, %v197
    %v326 = vpack.c.b16 %v206, %v198
    %v327 = vpack.c.b16 %v207, %v199
    %v328 = vpack.c.b16 %v208, %v200
    %v329 = vpack.c.b16 %v209, %v201
    %v330 = vpack.c.b16 %v218, %v210
    %v331 = vpack.c.b16 %v219, %v211
    %v332 = vpack.c.b16 %v220, %v212
    %v333 = vpack.c.b16 %v221, %v213
    %v334 = vpack.c.b16 %v222, %v214
    %v335 = vpack.c.b16 %v223, %v215
    %v336 = vpack.c.b16 %v224, %v216
    %v337 = vpack.c.b16 %v225, %v217
    %v338 = vpack.c.b16 %v234, %v226
    %v339 = vpack.c.b16 %v235, %v227
    %v340 = vpack.c.b16 %v236, %v228
    %v341 = vpack.c.b16 %v237, %v229
    %v342 = vpack.c.b16 %v238, %v230
    %v343 = vpack.c.b16 %v239, %v231
    %v344 = vpack.c.b16 %v240, %v232
    %v345 = vpack.c.b16 %v241, %v233
    %v346 = vpack.c.b16 %v250, %v242
    %v347 = vpack.c.b16 %v251, %v243
    %v348 = vpack.c.b16 %v252, %v244
    %v349 = vpack.c.b16 %v253, %v245
    %v350 = vpack.c.b16 %v254, %v246
    %v351 = vpack.c.b16 %v255, %v247
    %v352 = vpack.c.b16 %v256, %v248
    %v353 = vpack.c.b16 %v257, %v249
    %v354 = vpack.c.b16 %v266, %v258
    %v355 = vpack.c.b16 %v267, %v259
    %v356 = vpack.c.b16 %v268, %v260
    %v357 = vpack.c.b16 %v269, %v261
    %v358 = vpack.c.b16 %v270, %v262
    %v359 = vpack.c.b16 %v271, %v263
    %v360 = vpack.c.b16 %v272, %v264
    %v361 = vpack.c.b16 %v273, %v265
    %v362 = vpack.c.b16 %v282, %v274
    %v363 = vpack.c.b16 %v283, %v275
    %v364 = vpack.c.b16 %v284, %v276
    %v365 = vpack.c.b16 %v285, %v277
    %v366 = vpack.c.b16 %v286, %v278
    %v367 = vpack.c.b16 %v287, %v279
    %v368 = vpack.c.b16 %v288, %v280
    %v369 = vpack.c.b16 %v289, %v281
    %v370 = vpack.c.b16 %v298, %v290
    %v371 = vpack.c.b16 %v299, %v291
    %v372 = vpack.c.b16 %v300, %v292
    %v373 = vpack.c.b16 %v301, %v293
    %v374 = vpack.c.b16 %v302, %v294
    %v375 = vpack.c.b16 %v303, %v295
    %v376 = vpack.c.b16 %v304, %v296
    %v377 = vpack.c.b16 %v305, %v297
    %v378 = vpack.c.b16 %v314, %v306
    %v379 = vpack.c.b16 %v315, %v307
    %v380 = vpack.c.b16 %v316, %v308
    %v381 = vpack.c.b16 %v317, %v309
    %v382 = vpack.c.b16 %v318, %v310
    %v383 = vpack.c.b16 %v319, %v311
    %v384 = vpack.c.b16 %v320, %v312
    %v385 = vpack.c.b16 %v321, %v313
    %450 = vmatprep.subr.bf16.mxu0 %v379
    %451 = vmatpush1.bf16.msra.mxu0 %v378
    %452 = vmatprep.subr.bf16.mxu0 %v371
    %453 = vmatpush1.bf16.msra.mxu0 %v370
    %454 = vmatprep.subr.bf16.mxu0 %v363
    %455 = vmatpush1.bf16.msra.mxu0 %v362
    %456 = vmatprep.subr.bf16.mxu0 %v355
    %457 = vmatpush1.bf16.msra.mxu0 %v354
    %458 = vmatprep.subr.bf16.mxu0 %v347
    %459 = vmatpush1.bf16.msra.mxu0 %v346
    %460 = vmatprep.subr.bf16.mxu0 %v339
    %461 = vmatpush1.bf16.msra.mxu0 %v338
    %462 = vmatprep.subr.bf16.mxu0 %v331
    %463 = vmatpush1.bf16.msra.mxu0 %v330
    %464 = vmatprep.subr.bf16.mxu0 %v323
    %465 = vmatpush1.bf16.msra.mxu0 %v322
    %466 = vmatprep.subr.bf16.mxu0 0
    %467 = vmatpush2.bf16.msra.mxu0 0
    %468 = vmatprep.subr.bf16.mxu0 0
    %469 = vmatpush2.bf16.msra.mxu0 0
    %470 = vmatprep.subr.bf16.mxu0 0
    %471 = vmatpush2.bf16.msra.mxu0 0
    %472 = vmatprep.subr.bf16.mxu0 0
    %473 = vmatpush2.bf16.msra.mxu0 0
    %474 = vmatprep.subr.bf16.mxu0 0
    %475 = vmatpush2.bf16.msra.mxu0 0
    %476 = vmatprep.subr.bf16.mxu0 0
    %477 = vmatpush2.bf16.msra.mxu0 0
    %478 = vmatprep.subr.bf16.mxu0 0
    %479 = vmatpush2.bf16.msra.mxu0 0
    %480 = vmatprep.subr.bf16.mxu0 0
    %481 = vmatpush2.bf16.msra.mxu0 0
    %482 = vmatprep.mubr.bf16.mxu0 0
    %483 = vmatmul.mubr.bf16.gmra.mxu0 %v65
    %v484 = vpop.f32.mrf.mxu0
    %v485 = vadd.f32 0.0, %v484
    %v486 = vpop.f32.mrf.mxu0
    %v487 = vadd.f32 0.0, %v486
    %v488 = vpop.f32.mrf.mxu0
    %v489 = vpop.f32.mrf.mxu0
    %490 = vdwg.mxu0
    %491 = vmatprep.subr.bf16.mxu0 %v381
    %492 = vmatpush1.bf16.msra.mxu0 %v380
    %493 = vmatprep.subr.bf16.mxu0 %v373
    %494 = vmatpush1.bf16.msra.mxu0 %v372
    %495 = vmatprep.subr.bf16.mxu0 %v365
    %496 = vmatpush1.bf16.msra.mxu0 %v364
    %497 = vmatprep.subr.bf16.mxu0 %v357
    %498 = vmatpush1.bf16.msra.mxu0 %v356
    %499 = vmatprep.subr.bf16.mxu0 %v349
    %500 = vmatpush1.bf16.msra.mxu0 %v348
    %501 = vmatprep.subr.bf16.mxu0 %v341
    %502 = vmatpush1.bf16.msra.mxu0 %v340
    %503 = vmatprep.subr.bf16.mxu0 %v333
    %504 = vmatpush1.bf16.msra.mxu0 %v332
    %505 = vmatprep.subr.bf16.mxu0 %v325
    %506 = vmatpush1.bf16.msra.mxu0 %v324
    %507 = vmatprep.subr.bf16.mxu0 0
    %508 = vmatpush2.bf16.msra.mxu0 0
    %509 = vmatprep.subr.bf16.mxu0 0
    %510 = vmatpush2.bf16.msra.mxu0 0
    %511 = vmatprep.subr.bf16.mxu0 0
    %512 = vmatpush2.bf16.msra.mxu0 0
    %513 = vmatprep.subr.bf16.mxu0 0
    %514 = vmatpush2.bf16.msra.mxu0 0
    %515 = vmatprep.subr.bf16.mxu0 0
    %516 = vmatpush2.bf16.msra.mxu0 0
    %517 = vmatprep.subr.bf16.mxu0 0
    %518 = vmatpush2.bf16.msra.mxu0 0
    %519 = vmatprep.subr.bf16.mxu0 0
    %520 = vmatpush2.bf16.msra.mxu0 0
    %521 = vmatprep.subr.bf16.mxu0 0
    %522 = vmatpush2.bf16.msra.mxu0 0
    %523 = vmatprep.mubr.bf16.mxu0 0
    %524 = vmatmul.mubr.bf16.gmra.mxu0 %v65
    %v525 = vpop.f32.mrf.mxu0
    %v526 = vadd.f32 0.0, %v525
    %v527 = vpop.f32.mrf.mxu0
    %v528 = vadd.f32 0.0, %v527
    %v529 = vpop.f32.mrf.mxu0
    %v530 = vpop.f32.mrf.mxu0
    %531 = vdwg.mxu0
    %532 = vmatprep.subr.bf16.mxu0 %v383
    %533 = vmatpush1.bf16.msra.mxu0 %v382
    %534 = vmatprep.subr.bf16.mxu0 %v375
    %535 = vmatpush1.bf16.msra.mxu0 %v374
    %536 = vmatprep.subr.bf16.mxu0 %v367
    %537 = vmatpush1.bf16.msra.mxu0 %v366
    %538 = vmatprep.subr.bf16.mxu0 %v359
    %539 = vmatpush1.bf16.msra.mxu0 %v358
    %540 = vmatprep.subr.bf16.mxu0 %v351
    %541 = vmatpush1.bf16.msra.mxu0 %v350
    %542 = vmatprep.subr.bf16.mxu0 %v343
    %543 = vmatpush1.bf16.msra.mxu0 %v342
    %544 = vmatprep.subr.bf16.mxu0 %v335
    %545 = vmatpush1.bf16.msra.mxu0 %v334
    %546 = vmatprep.subr.bf16.mxu0 %v327
    %547 = vmatpush1.bf16.msra.mxu0 %v326
    %548 = vmatprep.subr.bf16.mxu0 0
    %549 = vmatpush2.bf16.msra.mxu0 0
    %550 = vmatprep.subr.bf16.mxu0 0
    %551 = vmatpush2.bf16.msra.mxu0 0
    %552 = vmatprep.subr.bf16.mxu0 0
    %553 = vmatpush2.bf16.msra.mxu0 0
    %554 = vmatprep.subr.bf16.mxu0 0
    %555 = vmatpush2.bf16.msra.mxu0 0
    %556 = vmatprep.subr.bf16.mxu0 0
    %557 = vmatpush2.bf16.msra.mxu0 0
    %558 = vmatprep.subr.bf16.mxu0 0
    %559 = vmatpush2.bf16.msra.mxu0 0
    %560 = vmatprep.subr.bf16.mxu0 0
    %561 = vmatpush2.bf16.msra.mxu0 0
    %562 = vmatprep.subr.bf16.mxu0 0
    %563 = vmatpush2.bf16.msra.mxu0 0
    %564 = vmatprep.mubr.bf16.mxu0 0
    %565 = vmatmul.mubr.bf16.gmra.mxu0 %v65
    %v566 = vpop.f32.mrf.mxu0
    %v567 = vadd.f32 0.0, %v566
    %v568 = vpop.f32.mrf.mxu0
    %v569 = vadd.f32 0.0, %v568
    %v570 = vpop.f32.mrf.mxu0
    %v571 = vpop.f32.mrf.mxu0
    %572 = vdwg.mxu0
    %573 = vmatprep.subr.bf16.mxu0 %v385
    %574 = vmatpush1.bf16.msra.mxu0 %v384
    %575 = vmatprep.subr.bf16.mxu0 %v377
    %576 = vmatpush1.bf16.msra.mxu0 %v376
    %577 = vmatprep.subr.bf16.mxu0 %v369
    %578 = vmatpush1.bf16.msra.mxu0 %v368
    %579 = vmatprep.subr.bf16.mxu0 %v361
    %580 = vmatpush1.bf16.msra.mxu0 %v360
    %581 = vmatprep.subr.bf16.mxu0 %v353
    %582 = vmatpush1.bf16.msra.mxu0 %v352
    %583 = vmatprep.subr.bf16.mxu0 %v345
    %584 = vmatpush1.bf16.msra.mxu0 %v344
    %585 = vmatprep.subr.bf16.mxu0 %v337
    %586 = vmatpush1.bf16.msra.mxu0 %v336
    %587 = vmatprep.subr.bf16.mxu0 %v329
    %588 = vmatpush1.bf16.msra.mxu0 %v328
    %589 = vmatprep.subr.bf16.mxu0 0
    %590 = vmatpush2.bf16.msra.mxu0 0
    %591 = vmatprep.subr.bf16.mxu0 0
    %592 = vmatpush2.bf16.msra.mxu0 0
    %593 = vmatprep.subr.bf16.mxu0 0
    %594 = vmatpush2.bf16.msra.mxu0 0
    %595 = vmatprep.subr.bf16.mxu0 0
    %596 = vmatpush2.bf16.msra.mxu0 0
    %597 = vmatprep.subr.bf16.mxu0 0
    %598 = vmatpush2.bf16.msra.mxu0 0
    %599 = vmatprep.subr.bf16.mxu0 0
    %600 = vmatpush2.bf16.msra.mxu0 0
    %601 = vmatprep.subr.bf16.mxu0 0
    %602 = vmatpush2.bf16.msra.mxu0 0
    %603 = vmatprep.subr.bf16.mxu0 0
    %604 = vmatpush2.bf16.msra.mxu0 0
    %605 = vmatprep.mubr.bf16.mxu0 0
    %606 = vmatmul.mubr.bf16.gmra.mxu0 %v65
    %v607 = vpop.f32.mrf.mxu0
    %v608 = vadd.f32 0.0, %v607
    %v609 = vpop.f32.mrf.mxu0
    %v610 = vadd.f32 0.0, %v609
    %v611 = vpop.f32.mrf.mxu0
    %v612 = vpop.f32.mrf.mxu0
    %613 = vdwg.mxu0
    %v614 = vpack.c.bf16 %v485, %v485
    %v615 = vpack.c.bf16 %v487, %v487
    %v616 = vpack.c.bf16 %v526, %v526
    %v617 = vpack.c.bf16 %v528, %v528
    %v618 = vpack.c.bf16 %v567, %v567
    %v619 = vpack.c.bf16 %v569, %v569
    %v620 = vpack.c.bf16 %v608, %v608
    %v621 = vpack.c.bf16 %v610, %v610
    %v622 = vmax.bf16 %v614, 0
    %v623 = vmax.bf16 %v615, 0
    %v624 = vmax.bf16 %v616, 0
    %v625 = vmax.bf16 %v617, 0
    %v626 = vmax.bf16 %v618, 0
    %v627 = vmax.bf16 %v619, 0
    %v628 = vmax.bf16 %v620, 0
    %v629 = vmax.bf16 %v621, 0
    %v630 = vld [vmem:[#allocation4] sm:$0xff]
    %v631 = vld [vmem:[#allocation4 + $0x8] sm:$0xf]
    %v632 = vld [vmem:[#allocation4 + $0xc] sm:$0xff]
    %v633 = vld [vmem:[#allocation4 + $0x14] sm:$0xf]
    %v634 = vld [vmem:[#allocation4 + $0x18] sm:$0xff]
    %v635 = vld [vmem:[#allocation4 + $0x20] sm:$0xf]
    %v636 = vld [vmem:[#allocation4 + $0x24] sm:$0xff]
    %v637 = vld [vmem:[#allocation4 + $0x2c] sm:$0xf]
    %v638 = vld [vmem:[#allocation4 + $0x30] sm:$0xff]
    %v639 = vld [vmem:[#allocation4 + $0x38] sm:$0xf]
    %v640 = vld [vmem:[#allocation4 + $0x3c] sm:$0xff]
    %v641 = vld [vmem:[#allocation4 + $0x44] sm:$0xf]
    %v642 = vld [vmem:[#allocation4 + $0x48] sm:$0xff]
    %v643 = vld [vmem:[#allocation4 + $0x50] sm:$0xf]
    %v644 = vld [vmem:[#allocation4 + $0x54] sm:$0xff]
    %v645 = vld [vmem:[#allocation4 + $0x5c] sm:$0xf]
    %v646 = vld [vmem:[#allocation4 + $0x60] sm:$0xff]
    %v647 = vld [vmem:[#allocation4 + $0x68] sm:$0xf]
    %v648 = vld [vmem:[#allocation4 + $0x6c] sm:$0xff]
    %v649 = vld [vmem:[#allocation4 + $0x74] sm:$0xf]
    %v650 = vld [vmem:[#allocation4 + $0x78] sm:$0xff]
    %v651 = vld [vmem:[#allocation4 + $0x80] sm:$0xf]
    %v652 = vld [vmem:[#allocation4 + $0x84] sm:$0xff]
    %v653 = vld [vmem:[#allocation4 + $0x8c] sm:$0xf]
    %v654 = vld [vmem:[#allocation4 + $0x90] sm:$0xff]
    %v655 = vld [vmem:[#allocation4 + $0x98] sm:$0xf]
    %v656 = vld [vmem:[#allocation4 + $0x9c] sm:$0xff]
    %v657 = vld [vmem:[#allocation4 + $0xa4] sm:$0xf]
    %v658 = vld [vmem:[#allocation4 + $0xa8] sm:$0xff]
    %v659 = vld [vmem:[#allocation4 + $0xb0] sm:$0xf]
    %v660 = vld [vmem:[#allocation4 + $0xb4] sm:$0xff]
    %v661 = vld [vmem:[#allocation4 + $0xbc] sm:$0xf]
    %v662 = vld [vmem:[#allocation4 + $0xc0] sm:$0xff]
    %v663 = vld [vmem:[#allocation4 + $0xc8] sm:$0xf]
    %v664 = vld [vmem:[#allocation4 + $0xcc] sm:$0xff]
    %v665 = vld [vmem:[#allocation4 + $0xd4] sm:$0xf]
    %v666 = vld [vmem:[#allocation4 + $0xd8] sm:$0xff]
    %v667 = vld [vmem:[#allocation4 + $0xe0] sm:$0xf]
    %v668 = vld [vmem:[#allocation4 + $0xe4] sm:$0xff]
    %v669 = vld [vmem:[#allocation4 + $0xec] sm:$0xf]
    %v670 = vld [vmem:[#allocation4 + $0xf0] sm:$0xff]
    %v671 = vld [vmem:[#allocation4 + $0xf8] sm:$0xf]
    %v672 = vld [vmem:[#allocation4 + $0xfc] sm:$0xff]
    %v673 = vld [vmem:[#allocation4 + $0x104] sm:$0xf]
    %v674 = vld [vmem:[#allocation4 + $0x108] sm:$0xff]
    %v675 = vld [vmem:[#allocation4 + $0x110] sm:$0xf]
    %v676 = vld [vmem:[#allocation4 + $0x114] sm:$0xff]
    %v677 = vld [vmem:[#allocation4 + $0x11c] sm:$0xf]
    %v678 = vld [vmem:[#allocation4 + $0x120] sm:$0xff]
    %v679 = vld [vmem:[#allocation4 + $0x128] sm:$0xf]
    %v680 = vld [vmem:[#allocation4 + $0x12c] sm:$0xff]
    %v681 = vld [vmem:[#allocation4 + $0x134] sm:$0xf]
    %v682 = vld [vmem:[#allocation4 + $0x138] sm:$0xff]
    %v683 = vld [vmem:[#allocation4 + $0x140] sm:$0xf]
    %v684 = vld [vmem:[#allocation4 + $0x144] sm:$0xff]
    %v685 = vld [vmem:[#allocation4 + $0x14c] sm:$0xf]
    %v686 = vld [vmem:[#allocation4 + $0x150] sm:$0xff]
    %v687 = vld [vmem:[#allocation4 + $0x158] sm:$0xf]
    %v688 = vld [vmem:[#allocation4 + $0x15c] sm:$0xff]
    %v689 = vld [vmem:[#allocation4 + $0x164] sm:$0xf]
    %v690 = vld [vmem:[#allocation4 + $0x168] sm:$0xff]
    %v691 = vld [vmem:[#allocation4 + $0x170] sm:$0xf]
    %v692 = vld [vmem:[#allocation4 + $0x174] sm:$0xff]
    %v693 = vld [vmem:[#allocation4 + $0x17c] sm:$0xf]
    %v694 = vld [vmem:[#allocation4 + $0x180] sm:$0xff]
    %v695 = vld [vmem:[#allocation4 + $0x188] sm:$0xf]
    %v696 = vld [vmem:[#allocation4 + $0x18c] sm:$0xff]
    %v697 = vld [vmem:[#allocation4 + $0x194] sm:$0xf]
    %v698 = vld [vmem:[#allocation4 + $0x198] sm:$0xff]
    %v699 = vld [vmem:[#allocation4 + $0x1a0] sm:$0xf]
    %v700 = vld [vmem:[#allocation4 + $0x1a4] sm:$0xff]
    %v701 = vld [vmem:[#allocation4 + $0x1ac] sm:$0xf]
    %v702 = vld [vmem:[#allocation4 + $0x1b0] sm:$0xff]
    %v703 = vld [vmem:[#allocation4 + $0x1b8] sm:$0xf]
    %v704 = vld [vmem:[#allocation4 + $0x1bc] sm:$0xff]
    %v705 = vld [vmem:[#allocation4 + $0x1c4] sm:$0xf]
    %v706 = vld [vmem:[#allocation4 + $0x1c8] sm:$0xff]
    %v707 = vld [vmem:[#allocation4 + $0x1d0] sm:$0xf]
    %v708 = vld [vmem:[#allocation4 + $0x1d4] sm:$0xff]
    %v709 = vld [vmem:[#allocation4 + $0x1dc] sm:$0xf]
    %v710 = vld [vmem:[#allocation4 + $0x1e0] sm:$0xff]
    %v711 = vld [vmem:[#allocation4 + $0x1e8] sm:$0xf]
    %v712 = vld [vmem:[#allocation4 + $0x1ec] sm:$0xff]
    %v713 = vld [vmem:[#allocation4 + $0x1f4] sm:$0xf]
    %v714 = vld [vmem:[#allocation4 + $0x1f8] sm:$0xff]
    %v715 = vld [vmem:[#allocation4 + $0x200] sm:$0xf]
    %v716 = vld [vmem:[#allocation4 + $0x204] sm:$0xff]
    %v717 = vld [vmem:[#allocation4 + $0x20c] sm:$0xf]
    %v718 = vld [vmem:[#allocation4 + $0x210] sm:$0xff]
    %v719 = vld [vmem:[#allocation4 + $0x218] sm:$0xf]
    %v720 = vld [vmem:[#allocation4 + $0x21c] sm:$0xff]
    %v721 = vld [vmem:[#allocation4 + $0x224] sm:$0xf]
    %v722 = vld [vmem:[#allocation4 + $0x228] sm:$0xff]
    %v723 = vld [vmem:[#allocation4 + $0x230] sm:$0xf]
    %v724 = vld [vmem:[#allocation4 + $0x234] sm:$0xff]
    %v725 = vld [vmem:[#allocation4 + $0x23c] sm:$0xf]
    %v726 = vld [vmem:[#allocation4 + $0x240] sm:$0xff]
    %v727 = vld [vmem:[#allocation4 + $0x248] sm:$0xf]
    %v728 = vld [vmem:[#allocation4 + $0x24c] sm:$0xff]
    %v729 = vld [vmem:[#allocation4 + $0x254] sm:$0xf]
    %v730 = vld [vmem:[#allocation4 + $0x258] sm:$0xff]
    %v731 = vld [vmem:[#allocation4 + $0x260] sm:$0xf]
    %v732 = vld [vmem:[#allocation4 + $0x264] sm:$0xff]
    %v733 = vld [vmem:[#allocation4 + $0x26c] sm:$0xf]
    %v734 = vld [vmem:[#allocation4 + $0x270] sm:$0xff]
    %v735 = vld [vmem:[#allocation4 + $0x278] sm:$0xf]
    %v736 = vld [vmem:[#allocation4 + $0x27c] sm:$0xff]
    %v737 = vld [vmem:[#allocation4 + $0x284] sm:$0xf]
    %v738 = vld [vmem:[#allocation4 + $0x288] sm:$0xff]
    %v739 = vld [vmem:[#allocation4 + $0x290] sm:$0xf]
    %v740 = vld [vmem:[#allocation4 + $0x294] sm:$0xff]
    %v741 = vld [vmem:[#allocation4 + $0x29c] sm:$0xf]
    %v742 = vld [vmem:[#allocation4 + $0x2a0] sm:$0xff]
    %v743 = vld [vmem:[#allocation4 + $0x2a8] sm:$0xf]
    %v744 = vld [vmem:[#allocation4 + $0x2ac] sm:$0xff]
    %v745 = vld [vmem:[#allocation4 + $0x2b4] sm:$0xf]
    %v746 = vld [vmem:[#allocation4 + $0x2b8] sm:$0xff]
    %v747 = vld [vmem:[#allocation4 + $0x2c0] sm:$0xf]
    %v748 = vld [vmem:[#allocation4 + $0x2c4] sm:$0xff]
    %v749 = vld [vmem:[#allocation4 + $0x2cc] sm:$0xf]
    %v750 = vld [vmem:[#allocation4 + $0x2d0] sm:$0xff]
    %v751 = vld [vmem:[#allocation4 + $0x2d8] sm:$0xf]
    %v752 = vld [vmem:[#allocation4 + $0x2dc] sm:$0xff]
    %v753 = vld [vmem:[#allocation4 + $0x2e4] sm:$0xf]
    %v754 = vld [vmem:[#allocation4 + $0x2e8] sm:$0xff]
    %v755 = vld [vmem:[#allocation4 + $0x2f0] sm:$0xf]
    %v756 = vld [vmem:[#allocation4 + $0x2f4] sm:$0xff]
    %v757 = vld [vmem:[#allocation4 + $0x2fc] sm:$0xf]
    %v886 = vunpack.c.l.b16 %v630
    %v887 = vunpack.c.h.b16 %v630
    %v888 = vunpack.c.l.b16 %v631
    %v889 = vunpack.c.l.b16 %v632
    %v890 = vunpack.c.h.b16 %v632
    %v891 = vunpack.c.l.b16 %v633
    %v892 = vunpack.c.l.b16 %v634
    %v893 = vunpack.c.h.b16 %v634
    %v894 = vunpack.c.l.b16 %v635
    %v895 = vunpack.c.l.b16 %v636
    %v896 = vunpack.c.h.b16 %v636
    %v897 = vunpack.c.l.b16 %v637
    %v898 = vunpack.c.l.b16 %v638
    %v899 = vunpack.c.h.b16 %v638
    %v900 = vunpack.c.l.b16 %v639
    %v901 = vunpack.c.l.b16 %v640
    %v902 = vunpack.c.h.b16 %v640
    %v903 = vunpack.c.l.b16 %v641
    %v904 = vunpack.c.l.b16 %v642
    %v905 = vunpack.c.h.b16 %v642
    %v906 = vunpack.c.l.b16 %v643
    %v907 = vunpack.c.l.b16 %v644
    %v908 = vunpack.c.h.b16 %v644
    %v909 = vunpack.c.l.b16 %v645
    %v910 = vunpack.c.l.b16 %v646
    %v911 = vunpack.c.h.b16 %v646
    %v912 = vunpack.c.l.b16 %v647
    %v913 = vunpack.c.l.b16 %v648
    %v914 = vunpack.c.h.b16 %v648
    %v915 = vunpack.c.l.b16 %v649
    %v916 = vunpack.c.l.b16 %v650
    %v917 = vunpack.c.h.b16 %v650
    %v918 = vunpack.c.l.b16 %v651
    %v919 = vunpack.c.l.b16 %v652
    %v920 = vunpack.c.h.b16 %v652
    %v921 = vunpack.c.l.b16 %v653
    %v922 = vunpack.c.l.b16 %v654
    %v923 = vunpack.c.h.b16 %v654
    %v924 = vunpack.c.l.b16 %v655
    %v925 = vunpack.c.l.b16 %v656
    %v926 = vunpack.c.h.b16 %v656
    %v927 = vunpack.c.l.b16 %v657
    %v928 = vunpack.c.l.b16 %v658
    %v929 = vunpack.c.h.b16 %v658
    %v930 = vunpack.c.l.b16 %v659
    %v931 = vunpack.c.l.b16 %v660
    %v932 = vunpack.c.h.b16 %v660
    %v933 = vunpack.c.l.b16 %v661
    %v934 = vunpack.c.l.b16 %v662
    %v935 = vunpack.c.h.b16 %v662
    %v936 = vunpack.c.l.b16 %v663
    %v937 = vunpack.c.l.b16 %v664
    %v938 = vunpack.c.h.b16 %v664
    %v939 = vunpack.c.l.b16 %v665
    %v940 = vunpack.c.l.b16 %v666
    %v941 = vunpack.c.h.b16 %v666
    %v942 = vunpack.c.l.b16 %v667
    %v943 = vunpack.c.l.b16 %v668
    %v944 = vunpack.c.h.b16 %v668
    %v945 = vunpack.c.l.b16 %v669
    %v946 = vunpack.c.l.b16 %v670
    %v947 = vunpack.c.h.b16 %v670
    %v948 = vunpack.c.l.b16 %v671
    %v949 = vunpack.c.l.b16 %v672
    %v950 = vunpack.c.h.b16 %v672
    %v951 = vunpack.c.l.b16 %v673
    %v952 = vunpack.c.l.b16 %v674
    %v953 = vunpack.c.h.b16 %v674
    %v954 = vunpack.c.l.b16 %v675
    %v955 = vunpack.c.l.b16 %v676
    %v956 = vunpack.c.h.b16 %v676
    %v957 = vunpack.c.l.b16 %v677
    %v958 = vunpack.c.l.b16 %v678
    %v959 = vunpack.c.h.b16 %v678
    %v960 = vunpack.c.l.b16 %v679
    %v961 = vunpack.c.l.b16 %v680
    %v962 = vunpack.c.h.b16 %v680
    %v963 = vunpack.c.l.b16 %v681
    %v964 = vunpack.c.l.b16 %v682
    %v965 = vunpack.c.h.b16 %v682
    %v966 = vunpack.c.l.b16 %v683
    %v967 = vunpack.c.l.b16 %v684
    %v968 = vunpack.c.h.b16 %v684
    %v969 = vunpack.c.l.b16 %v685
    %v970 = vunpack.c.l.b16 %v686
    %v971 = vunpack.c.h.b16 %v686
    %v972 = vunpack.c.l.b16 %v687
    %v973 = vunpack.c.l.b16 %v688
    %v974 = vunpack.c.h.b16 %v688
    %v975 = vunpack.c.l.b16 %v689
    %v976 = vunpack.c.l.b16 %v690
    %v977 = vunpack.c.h.b16 %v690
    %v978 = vunpack.c.l.b16 %v691
    %v979 = vunpack.c.l.b16 %v692
    %v980 = vunpack.c.h.b16 %v692
    %v981 = vunpack.c.l.b16 %v693
    %v982 = vunpack.c.l.b16 %v694
    %v983 = vunpack.c.h.b16 %v694
    %v984 = vunpack.c.l.b16 %v695
    %v985 = vunpack.c.l.b16 %v696
    %v986 = vunpack.c.h.b16 %v696
    %v987 = vunpack.c.l.b16 %v697
    %v988 = vunpack.c.l.b16 %v698
    %v989 = vunpack.c.h.b16 %v698
    %v990 = vunpack.c.l.b16 %v699
    %v991 = vunpack.c.l.b16 %v700
    %v992 = vunpack.c.h.b16 %v700
    %v993 = vunpack.c.l.b16 %v701
    %v994 = vunpack.c.l.b16 %v702
    %v995 = vunpack.c.h.b16 %v702
    %v996 = vunpack.c.l.b16 %v703
    %v997 = vunpack.c.l.b16 %v704
    %v998 = vunpack.c.h.b16 %v704
    %v999 = vunpack.c.l.b16 %v705
    %v1000 = vunpack.c.l.b16 %v706
    %v1001 = vunpack.c.h.b16 %v706
    %v1002 = vunpack.c.l.b16 %v707
    %v1003 = vunpack.c.l.b16 %v708
    %v1004 = vunpack.c.h.b16 %v708
    %v1005 = vunpack.c.l.b16 %v709
    %v1006 = vunpack.c.l.b16 %v710
    %v1007 = vunpack.c.h.b16 %v710
    %v1008 = vunpack.c.l.b16 %v711
    %v1009 = vunpack.c.l.b16 %v712
    %v1010 = vunpack.c.h.b16 %v712
    %v1011 = vunpack.c.l.b16 %v713
    %v1012 = vunpack.c.l.b16 %v714
    %v1013 = vunpack.c.h.b16 %v714
    %v1014 = vunpack.c.l.b16 %v715
    %v1015 = vunpack.c.l.b16 %v716
    %v1016 = vunpack.c.h.b16 %v716
    %v1017 = vunpack.c.l.b16 %v717
    %v1018 = vunpack.c.l.b16 %v718
    %v1019 = vunpack.c.h.b16 %v718
    %v1020 = vunpack.c.l.b16 %v719
    %v1021 = vunpack.c.l.b16 %v720
    %v1022 = vunpack.c.h.b16 %v720
    %v1023 = vunpack.c.l.b16 %v721
    %v1024 = vunpack.c.l.b16 %v722
    %v1025 = vunpack.c.h.b16 %v722
    %v1026 = vunpack.c.l.b16 %v723
    %v1027 = vunpack.c.l.b16 %v724
    %v1028 = vunpack.c.h.b16 %v724
    %v1029 = vunpack.c.l.b16 %v725
    %v1030 = vunpack.c.l.b16 %v726
    %v1031 = vunpack.c.h.b16 %v726
    %v1032 = vunpack.c.l.b16 %v727
    %v1033 = vunpack.c.l.b16 %v728
    %v1034 = vunpack.c.h.b16 %v728
    %v1035 = vunpack.c.l.b16 %v729
    %v1036 = vunpack.c.l.b16 %v730
    %v1037 = vunpack.c.h.b16 %v730
    %v1038 = vunpack.c.l.b16 %v731
    %v1039 = vunpack.c.l.b16 %v732
    %v1040 = vunpack.c.h.b16 %v732
    %v1041 = vunpack.c.l.b16 %v733
    %v1042 = vunpack.c.l.b16 %v734
    %v1043 = vunpack.c.h.b16 %v734
    %v1044 = vunpack.c.l.b16 %v735
    %v1045 = vunpack.c.l.b16 %v736
    %v1046 = vunpack.c.h.b16 %v736
    %v1047 = vunpack.c.l.b16 %v737
    %v1048 = vunpack.c.l.b16 %v738
    %v1049 = vunpack.c.h.b16 %v738
    %v1050 = vunpack.c.l.b16 %v739
    %v1051 = vunpack.c.l.b16 %v740
    %v1052 = vunpack.c.h.b16 %v740
    %v1053 = vunpack.c.l.b16 %v741
    %v1054 = vunpack.c.l.b16 %v742
    %v1055 = vunpack.c.h.b16 %v742
    %v1056 = vunpack.c.l.b16 %v743
    %v1057 = vunpack.c.l.b16 %v744
    %v1058 = vunpack.c.h.b16 %v744
    %v1059 = vunpack.c.l.b16 %v745
    %v1060 = vunpack.c.l.b16 %v746
    %v1061 = vunpack.c.h.b16 %v746
    %v1062 = vunpack.c.l.b16 %v747
    %v1063 = vunpack.c.l.b16 %v748
    %v1064 = vunpack.c.h.b16 %v748
    %v1065 = vunpack.c.l.b16 %v749
    %v1066 = vunpack.c.l.b16 %v750
    %v1067 = vunpack.c.h.b16 %v750
    %v1068 = vunpack.c.l.b16 %v751
    %v1069 = vunpack.c.l.b16 %v752
    %v1070 = vunpack.c.h.b16 %v752
    %v1071 = vunpack.c.l.b16 %v753
    %v1072 = vunpack.c.l.b16 %v754
    %v1073 = vunpack.c.h.b16 %v754
    %v1074 = vunpack.c.l.b16 %v755
    %v1075 = vunpack.c.l.b16 %v756
    %v1076 = vunpack.c.h.b16 %v756
    %v1077 = vunpack.c.l.b16 %v757
    %v1078 = vpack.c.b16 %v889, %v886
    %v1079 = vpack.c.b16 %v890, %v887
    %v1080 = vpack.c.b16 %v891, %v888
    %v1081 = vpack.c.b16 %v895, %v892
    %v1082 = vpack.c.b16 %v896, %v893
    %v1083 = vpack.c.b16 %v897, %v894
    %v1084 = vpack.c.b16 %v901, %v898
    %v1085 = vpack.c.b16 %v902, %v899
    %v1086 = vpack.c.b16 %v903, %v900
    %v1087 = vpack.c.b16 %v907, %v904
    %v1088 = vpack.c.b16 %v908, %v905
    %v1089 = vpack.c.b16 %v909, %v906
    %v1090 = vpack.c.b16 %v913, %v910
    %v1091 = vpack.c.b16 %v914, %v911
    %v1092 = vpack.c.b16 %v915, %v912
    %v1093 = vpack.c.b16 %v919, %v916
    %v1094 = vpack.c.b16 %v920, %v917
    %v1095 = vpack.c.b16 %v921, %v918
    %v1096 = vpack.c.b16 %v925, %v922
    %v1097 = vpack.c.b16 %v926, %v923
    %v1098 = vpack.c.b16 %v927, %v924
    %v1099 = vpack.c.b16 %v931, %v928
    %v1100 = vpack.c.b16 %v932, %v929
    %v1101 = vpack.c.b16 %v933, %v930
    %v1102 = vpack.c.b16 %v937, %v934
    %v1103 = vpack.c.b16 %v938, %v935
    %v1104 = vpack.c.b16 %v939, %v936
    %v1105 = vpack.c.b16 %v943, %v940
    %v1106 = vpack.c.b16 %v944, %v941
    %v1107 = vpack.c.b16 %v945, %v942
    %v1108 = vpack.c.b16 %v949, %v946
    %v1109 = vpack.c.b16 %v950, %v947
    %v1110 = vpack.c.b16 %v951, %v948
    %v1111 = vpack.c.b16 %v955, %v952
    %v1112 = vpack.c.b16 %v956, %v953
    %v1113 = vpack.c.b16 %v957, %v954
    %v1114 = vpack.c.b16 %v961, %v958
    %v1115 = vpack.c.b16 %v962, %v959
    %v1116 = vpack.c.b16 %v963, %v960
    %v1117 = vpack.c.b16 %v967, %v964
    %v1118 = vpack.c.b16 %v968, %v965
    %v1119 = vpack.c.b16 %v969, %v966
    %v1120 = vpack.c.b16 %v973, %v970
    %v1121 = vpack.c.b16 %v974, %v971
    %v1122 = vpack.c.b16 %v975, %v972
    %v1123 = vpack.c.b16 %v979, %v976
    %v1124 = vpack.c.b16 %v980, %v977
    %v1125 = vpack.c.b16 %v981, %v978
    %v1126 = vpack.c.b16 %v985, %v982
    %v1127 = vpack.c.b16 %v986, %v983
    %v1128 = vpack.c.b16 %v987, %v984
    %v1129 = vpack.c.b16 %v991, %v988
    %v1130 = vpack.c.b16 %v992, %v989
    %v1131 = vpack.c.b16 %v993, %v990
    %v1132 = vpack.c.b16 %v997, %v994
    %v1133 = vpack.c.b16 %v998, %v995
    %v1134 = vpack.c.b16 %v999, %v996
    %v1135 = vpack.c.b16 %v1003, %v1000
    %v1136 = vpack.c.b16 %v1004, %v1001
    %v1137 = vpack.c.b16 %v1005, %v1002
    %v1138 = vpack.c.b16 %v1009, %v1006
    %v1139 = vpack.c.b16 %v1010, %v1007
    %v1140 = vpack.c.b16 %v1011, %v1008
    %v1141 = vpack.c.b16 %v1015, %v1012
    %v1142 = vpack.c.b16 %v1016, %v1013
    %v1143 = vpack.c.b16 %v1017, %v1014
    %v1144 = vpack.c.b16 %v1021, %v1018
    %v1145 = vpack.c.b16 %v1022, %v1019
    %v1146 = vpack.c.b16 %v1023, %v1020
    %v1147 = vpack.c.b16 %v1027, %v1024
    %v1148 = vpack.c.b16 %v1028, %v1025
    %v1149 = vpack.c.b16 %v1029, %v1026
    %v1150 = vpack.c.b16 %v1033, %v1030
    %v1151 = vpack.c.b16 %v1034, %v1031
    %v1152 = vpack.c.b16 %v1035, %v1032
    %v1153 = vpack.c.b16 %v1039, %v1036
    %v1154 = vpack.c.b16 %v1040, %v1037
    %v1155 = vpack.c.b16 %v1041, %v1038
    %v1156 = vpack.c.b16 %v1045, %v1042
    %v1157 = vpack.c.b16 %v1046, %v1043
    %v1158 = vpack.c.b16 %v1047, %v1044
    %v1159 = vpack.c.b16 %v1051, %v1048
    %v1160 = vpack.c.b16 %v1052, %v1049
    %v1161 = vpack.c.b16 %v1053, %v1050
    %v1162 = vpack.c.b16 %v1057, %v1054
    %v1163 = vpack.c.b16 %v1058, %v1055
    %v1164 = vpack.c.b16 %v1059, %v1056
    %v1165 = vpack.c.b16 %v1063, %v1060
    %v1166 = vpack.c.b16 %v1064, %v1061
    %v1167 = vpack.c.b16 %v1065, %v1062
    %v1168 = vpack.c.b16 %v1069, %v1066
    %v1169 = vpack.c.b16 %v1070, %v1067
    %v1170 = vpack.c.b16 %v1071, %v1068
    %v1171 = vpack.c.b16 %v1075, %v1072
    %v1172 = vpack.c.b16 %v1076, %v1073
    %v1173 = vpack.c.b16 %v1077, %v1074
    %1270 = vmatprep.subr.bf16.mxu0 %v1100
    %1271 = vmatpush1.bf16.msra.mxu0 %v1099
    %1272 = vmatprep.subr.bf16.mxu0 %v1097
    %1273 = vmatpush1.bf16.msra.mxu0 %v1096
    %1274 = vmatprep.subr.bf16.mxu0 %v1094
    %1275 = vmatpush1.bf16.msra.mxu0 %v1093
    %1276 = vmatprep.subr.bf16.mxu0 %v1091
    %1277 = vmatpush1.bf16.msra.mxu0 %v1090
    %1278 = vmatprep.subr.bf16.mxu0 %v1088
    %1279 = vmatpush1.bf16.msra.mxu0 %v1087
    %1280 = vmatprep.subr.bf16.mxu0 %v1085
    %1281 = vmatpush1.bf16.msra.mxu0 %v1084
    %1282 = vmatprep.subr.bf16.mxu0 %v1082
    %1283 = vmatpush1.bf16.msra.mxu0 %v1081
    %1284 = vmatprep.subr.bf16.mxu0 %v1079
    %1285 = vmatpush1.bf16.msra.mxu0 %v1078
    %1286 = vmatprep.subr.bf16.mxu0 %v1124
    %1287 = vmatpush2.bf16.msra.mxu0 %v1123
    %1288 = vmatprep.subr.bf16.mxu0 %v1121
    %1289 = vmatpush2.bf16.msra.mxu0 %v1120
    %1290 = vmatprep.subr.bf16.mxu0 %v1118
    %1291 = vmatpush2.bf16.msra.mxu0 %v1117
    %1292 = vmatprep.subr.bf16.mxu0 %v1115
    %1293 = vmatpush2.bf16.msra.mxu0 %v1114
    %1294 = vmatprep.subr.bf16.mxu0 %v1112
    %1295 = vmatpush2.bf16.msra.mxu0 %v1111
    %1296 = vmatprep.subr.bf16.mxu0 %v1109
    %1297 = vmatpush2.bf16.msra.mxu0 %v1108
    %1298 = vmatprep.subr.bf16.mxu0 %v1106
    %1299 = vmatpush2.bf16.msra.mxu0 %v1105
    %1300 = vmatprep.subr.bf16.mxu0 %v1103
    %1301 = vmatpush2.bf16.msra.mxu0 %v1102
    %1302 = vmatprep.mubr.bf16.mxu0 %v623
    %1303 = vmatmul.mubr.bf16.gmra.mxu0 %v622
    %v1304 = vpop.f32.mrf.mxu0
    %v1305 = vadd.f32 0.0, %v1304
    %v1306 = vpop.f32.mrf.mxu0
    %v1307 = vadd.f32 0.0, %v1306
    %v1308 = vpop.f32.mrf.mxu0
    %v1309 = vpop.f32.mrf.mxu0
    %1310 = vdwg.mxu0
    %1311 = vmatprep.subr.bf16.mxu0 %v1148
    %1312 = vmatpush1.bf16.msra.mxu0 %v1147
    %1313 = vmatprep.subr.bf16.mxu0 %v1145
    %1314 = vmatpush1.bf16.msra.mxu0 %v1144
    %1315 = vmatprep.subr.bf16.mxu0 %v1142
    %1316 = vmatpush1.bf16.msra.mxu0 %v1141
    %1317 = vmatprep.subr.bf16.mxu0 %v1139
    %1318 = vmatpush1.bf16.msra.mxu0 %v1138
    %1319 = vmatprep.subr.bf16.mxu0 %v1136
    %1320 = vmatpush1.bf16.msra.mxu0 %v1135
    %1321 = vmatprep.subr.bf16.mxu0 %v1133
    %1322 = vmatpush1.bf16.msra.mxu0 %v1132
    %1323 = vmatprep.subr.bf16.mxu0 %v1130
    %1324 = vmatpush1.bf16.msra.mxu0 %v1129
    %1325 = vmatprep.subr.bf16.mxu0 %v1127
    %1326 = vmatpush1.bf16.msra.mxu0 %v1126
    %1327 = vmatprep.subr.bf16.mxu0 %v1172
    %1328 = vmatpush2.bf16.msra.mxu0 %v1171
    %1329 = vmatprep.subr.bf16.mxu0 %v1169
    %1330 = vmatpush2.bf16.msra.mxu0 %v1168
    %1331 = vmatprep.subr.bf16.mxu0 %v1166
    %1332 = vmatpush2.bf16.msra.mxu0 %v1165
    %1333 = vmatprep.subr.bf16.mxu0 %v1163
    %1334 = vmatpush2.bf16.msra.mxu0 %v1162
    %1335 = vmatprep.subr.bf16.mxu0 %v1160
    %1336 = vmatpush2.bf16.msra.mxu0 %v1159
    %1337 = vmatprep.subr.bf16.mxu0 %v1157
    %1338 = vmatpush2.bf16.msra.mxu0 %v1156
    %1339 = vmatprep.subr.bf16.mxu0 %v1154
    %1340 = vmatpush2.bf16.msra.mxu0 %v1153
    %1341 = vmatprep.subr.bf16.mxu0 %v1151
    %1342 = vmatpush2.bf16.msra.mxu0 %v1150
    %1343 = vmatprep.mubr.bf16.mxu0 %v625
    %1344 = vmatmul.mubr.bf16.gmra.mxu0 %v624
    %v1345 = vpop.f32.mrf.mxu0
    %v1346 = vadd.f32 %v1305, %v1345
    %v1347 = vpop.f32.mrf.mxu0
    %v1348 = vadd.f32 %v1307, %v1347
    %v1349 = vpop.f32.mrf.mxu0
    %v1350 = vpop.f32.mrf.mxu0
    %1351 = vdwg.mxu0
    %1352 = vmatprep.subr.bf16.mxu0 0
    %1353 = vmatpush1.bf16.msra.mxu0 %v1101
    %1354 = vmatprep.subr.bf16.mxu0 0
    %1355 = vmatpush1.bf16.msra.mxu0 %v1098
    %1356 = vmatprep.subr.bf16.mxu0 0
    %1357 = vmatpush1.bf16.msra.mxu0 %v1095
    %1358 = vmatprep.subr.bf16.mxu0 0
    %1359 = vmatpush1.bf16.msra.mxu0 %v1092
    %1360 = vmatprep.subr.bf16.mxu0 0
    %1361 = vmatpush1.bf16.msra.mxu0 %v1089
    %1362 = vmatprep.subr.bf16.mxu0 0
    %1363 = vmatpush1.bf16.msra.mxu0 %v1086
    %1364 = vmatprep.subr.bf16.mxu0 0
    %1365 = vmatpush1.bf16.msra.mxu0 %v1083
    %1366 = vmatprep.subr.bf16.mxu0 0
    %1367 = vmatpush1.bf16.msra.mxu0 %v1080
    %1368 = vmatprep.subr.bf16.mxu0 0
    %1369 = vmatpush2.bf16.msra.mxu0 %v1125
    %1370 = vmatprep.subr.bf16.mxu0 0
    %1371 = vmatpush2.bf16.msra.mxu0 %v1122
    %1372 = vmatprep.subr.bf16.mxu0 0
    %1373 = vmatpush2.bf16.msra.mxu0 %v1119
    %1374 = vmatprep.subr.bf16.mxu0 0
    %1375 = vmatpush2.bf16.msra.mxu0 %v1116
    %1376 = vmatprep.subr.bf16.mxu0 0
    %1377 = vmatpush2.bf16.msra.mxu0 %v1113
    %1378 = vmatprep.subr.bf16.mxu0 0
    %1379 = vmatpush2.bf16.msra.mxu0 %v1110
    %1380 = vmatprep.subr.bf16.mxu0 0
    %1381 = vmatpush2.bf16.msra.mxu0 %v1107
    %1382 = vmatprep.subr.bf16.mxu0 0
    %1383 = vmatpush2.bf16.msra.mxu0 %v1104
    %1384 = vmatprep.mubr.bf16.mxu0 %v623
    %1385 = vmatmul.mubr.bf16.gmra.mxu0 %v622
    %v1386 = vpop.f32.mrf.mxu0
    %v1387 = vadd.f32 0.0, %v1386
    %v1388 = vpop.f32.mrf.mxu0
    %v1389 = vpop.f32.mrf.mxu0
    %v1390 = vpop.f32.mrf.mxu0
    %1391 = vdwg.mxu0
    %1392 = vmatprep.subr.bf16.mxu0 0
    %1393 = vmatpush1.bf16.msra.mxu0 %v1149
    %1394 = vmatprep.subr.bf16.mxu0 0
    %1395 = vmatpush1.bf16.msra.mxu0 %v1146
    %1396 = vmatprep.subr.bf16.mxu0 0
    %1397 = vmatpush1.bf16.msra.mxu0 %v1143
    %1398 = vmatprep.subr.bf16.mxu0 0
    %1399 = vmatpush1.bf16.msra.mxu0 %v1140
    %1400 = vmatprep.subr.bf16.mxu0 0
    %1401 = vmatpush1.bf16.msra.mxu0 %v1137
    %1402 = vmatprep.subr.bf16.mxu0 0
    %1403 = vmatpush1.bf16.msra.mxu0 %v1134
    %1404 = vmatprep.subr.bf16.mxu0 0
    %1405 = vmatpush1.bf16.msra.mxu0 %v1131
    %1406 = vmatprep.subr.bf16.mxu0 0
    %1407 = vmatpush1.bf16.msra.mxu0 %v1128
    %1408 = vmatprep.subr.bf16.mxu0 0
    %1409 = vmatpush2.bf16.msra.mxu0 %v1173
    %1410 = vmatprep.subr.bf16.mxu0 0
    %1411 = vmatpush2.bf16.msra.mxu0 %v1170
    %1412 = vmatprep.subr.bf16.mxu0 0
    %1413 = vmatpush2.bf16.msra.mxu0 %v1167
    %1414 = vmatprep.subr.bf16.mxu0 0
    %1415 = vmatpush2.bf16.msra.mxu0 %v1164
    %1416 = vmatprep.subr.bf16.mxu0 0
    %1417 = vmatpush2.bf16.msra.mxu0 %v1161
    %1418 = vmatprep.subr.bf16.mxu0 0
    %1419 = vmatpush2.bf16.msra.mxu0 %v1158
    %1420 = vmatprep.subr.bf16.mxu0 0
    %1421 = vmatpush2.bf16.msra.mxu0 %v1155
    %1422 = vmatprep.subr.bf16.mxu0 0
    %1423 = vmatpush2.bf16.msra.mxu0 %v1152
    %1424 = vmatprep.mubr.bf16.mxu0 %v625
    %1425 = vmatmul.mubr.bf16.gmra.mxu0 %v624
    %v1426 = vpop.f32.mrf.mxu0
    %v1427 = vadd.f32 %v1387, %v1426
    %v1428 = vpop.f32.mrf.mxu0
    %v1429 = vpop.f32.mrf.mxu0
    %v1430 = vpop.f32.mrf.mxu0
    %1431 = vdwg.mxu0
    %v1432 = vmax.f32 %v1346, 0.0
    %v1433 = vmax.f32 %v1348, 0.0
    %v1434 = vmax.f32 %v1427, 0.0
    %v1435 = vld [vmem:[#allocation6] sm:$0xff]
    %v1436 = vld [vmem:[#allocation6 + $0x8] sm:$0xf]
    %v1437 = vld [vmem:[#allocation6 + $0xc] sm:$0xff]
    %v1438 = vld [vmem:[#allocation6 + $0x14] sm:$0xf]
    %v1439 = vld [vmem:[#allocation6 + $0x18] sm:$0xff]
    %v1440 = vld [vmem:[#allocation6 + $0x20] sm:$0xf]
    %v1441 = vld [vmem:[#allocation6 + $0x24] sm:$0xff]
    %v1442 = vld [vmem:[#allocation6 + $0x2c] sm:$0xf]
    %v1443 = vld [vmem:[#allocation6 + $0x30] sm:$0xff]
    %v1444 = vld [vmem:[#allocation6 + $0x38] sm:$0xf]
    %v1445 = vld [vmem:[#allocation6 + $0x3c] sm:$0xff]
    %v1446 = vld [vmem:[#allocation6 + $0x44] sm:$0xf]
    %v1447 = vld [vmem:[#allocation6 + $0x48] sm:$0xff]
    %v1448 = vld [vmem:[#allocation6 + $0x50] sm:$0xf]
    %v1449 = vld [vmem:[#allocation6 + $0x54] sm:$0xff]
    %v1450 = vld [vmem:[#allocation6 + $0x5c] sm:$0xf]
    %v1451 = vld [vmem:[#allocation6 + $0x60] sm:$0xff]
    %v1452 = vld [vmem:[#allocation6 + $0x68] sm:$0xf]
    %v1453 = vld [vmem:[#allocation6 + $0x6c] sm:$0xff]
    %v1454 = vld [vmem:[#allocation6 + $0x74] sm:$0xf]
    %v1455 = vld [vmem:[#allocation6 + $0x78] sm:$0xff]
    %v1456 = vld [vmem:[#allocation6 + $0x80] sm:$0xf]
    %v1457 = vld [vmem:[#allocation6 + $0x84] sm:$0xff]
    %v1458 = vld [vmem:[#allocation6 + $0x8c] sm:$0xf]
    %v1459 = vld [vmem:[#allocation6 + $0x90] sm:$0xff]
    %v1460 = vld [vmem:[#allocation6 + $0x98] sm:$0xf]
    %v1461 = vld [vmem:[#allocation6 + $0x9c] sm:$0xff]
    %v1462 = vld [vmem:[#allocation6 + $0xa4] sm:$0xf]
    %v1463 = vld [vmem:[#allocation6 + $0xa8] sm:$0xff]
    %v1464 = vld [vmem:[#allocation6 + $0xb0] sm:$0xf]
    %v1465 = vld [vmem:[#allocation6 + $0xb4] sm:$0xff]
    %v1466 = vld [vmem:[#allocation6 + $0xbc] sm:$0xf]
    %v1467 = vld [vmem:[#allocation6 + $0xc0] sm:$0xff]
    %v1468 = vld [vmem:[#allocation6 + $0xc8] sm:$0xf]
    %v1469 = vld [vmem:[#allocation6 + $0xcc] sm:$0xff]
    %v1470 = vld [vmem:[#allocation6 + $0xd4] sm:$0xf]
    %v1471 = vld [vmem:[#allocation6 + $0xd8] sm:$0xff]
    %v1472 = vld [vmem:[#allocation6 + $0xe0] sm:$0xf]
    %v1473 = vld [vmem:[#allocation6 + $0xe4] sm:$0xff]
    %v1474 = vld [vmem:[#allocation6 + $0xec] sm:$0xf]
    %v1475 = vld [vmem:[#allocation6 + $0xf0] sm:$0xff]
    %v1476 = vld [vmem:[#allocation6 + $0xf8] sm:$0xf]
    %v1477 = vld [vmem:[#allocation6 + $0xfc] sm:$0xff]
    %v1478 = vld [vmem:[#allocation6 + $0x104] sm:$0xf]
    %v1479 = vld [vmem:[#allocation6 + $0x108] sm:$0xff]
    %v1480 = vld [vmem:[#allocation6 + $0x110] sm:$0xf]
    %v1481 = vld [vmem:[#allocation6 + $0x114] sm:$0xff]
    %v1482 = vld [vmem:[#allocation6 + $0x11c] sm:$0xf]
    %v1483 = vld [vmem:[#allocation6 + $0x120] sm:$0xff]
    %v1484 = vld [vmem:[#allocation6 + $0x128] sm:$0xf]
    %v1485 = vld [vmem:[#allocation6 + $0x12c] sm:$0xff]
    %v1486 = vld [vmem:[#allocation6 + $0x134] sm:$0xf]
    %v1487 = vld [vmem:[#allocation6 + $0x138] sm:$0xff]
    %v1488 = vld [vmem:[#allocation6 + $0x140] sm:$0xf]
    %v1489 = vld [vmem:[#allocation6 + $0x144] sm:$0xff]
    %v1490 = vld [vmem:[#allocation6 + $0x14c] sm:$0xf]
    %v1491 = vld [vmem:[#allocation6 + $0x150] sm:$0xff]
    %v1492 = vld [vmem:[#allocation6 + $0x158] sm:$0xf]
    %v1493 = vld [vmem:[#allocation6 + $0x15c] sm:$0xff]
    %v1494 = vld [vmem:[#allocation6 + $0x164] sm:$0xf]
    %v1495 = vld [vmem:[#allocation6 + $0x168] sm:$0xff]
    %v1496 = vld [vmem:[#allocation6 + $0x170] sm:$0xf]
    %v1497 = vld [vmem:[#allocation6 + $0x174] sm:$0xff]
    %v1498 = vld [vmem:[#allocation6 + $0x17c] sm:$0xf]
    %v1499 = vld [vmem:[#allocation6 + $0x180] sm:$0xff]
    %v1500 = vld [vmem:[#allocation6 + $0x188] sm:$0xf]
    %v1501 = vld [vmem:[#allocation6 + $0x18c] sm:$0xff]
    %v1502 = vld [vmem:[#allocation6 + $0x194] sm:$0xf]
    %v1503 = vld [vmem:[#allocation6 + $0x198] sm:$0xff]
    %v1504 = vld [vmem:[#allocation6 + $0x1a0] sm:$0xf]
    %v1505 = vld [vmem:[#allocation6 + $0x1a4] sm:$0xff]
    %v1506 = vld [vmem:[#allocation6 + $0x1ac] sm:$0xf]
    %v1507 = vld [vmem:[#allocation6 + $0x1b0] sm:$0xff]
    %v1508 = vld [vmem:[#allocation6 + $0x1b8] sm:$0xf]
    %v1509 = vld [vmem:[#allocation6 + $0x1bc] sm:$0xff]
    %v1510 = vld [vmem:[#allocation6 + $0x1c4] sm:$0xf]
    %v1511 = vld [vmem:[#allocation6 + $0x1c8] sm:$0xff]
    %v1512 = vld [vmem:[#allocation6 + $0x1d0] sm:$0xf]
    %v1513 = vld [vmem:[#allocation6 + $0x1d4] sm:$0xff]
    %v1514 = vld [vmem:[#allocation6 + $0x1dc] sm:$0xf]
    %v1515 = vld [vmem:[#allocation6 + $0x1e0] sm:$0xff]
    %v1516 = vld [vmem:[#allocation6 + $0x1e8] sm:$0xf]
    %v1517 = vld [vmem:[#allocation6 + $0x1ec] sm:$0xff]
    %v1518 = vld [vmem:[#allocation6 + $0x1f4] sm:$0xf]
    %v1519 = vld [vmem:[#allocation6 + $0x1f8] sm:$0xff]
    %v1520 = vld [vmem:[#allocation6 + $0x200] sm:$0xf]
    %v1521 = vld [vmem:[#allocation6 + $0x204] sm:$0xff]
    %v1522 = vld [vmem:[#allocation6 + $0x20c] sm:$0xf]
    %v1523 = vld [vmem:[#allocation6 + $0x210] sm:$0xff]
    %v1524 = vld [vmem:[#allocation6 + $0x218] sm:$0xf]
    %v1525 = vld [vmem:[#allocation6 + $0x21c] sm:$0xff]
    %v1526 = vld [vmem:[#allocation6 + $0x224] sm:$0xf]
    %v1527 = vld [vmem:[#allocation6 + $0x228] sm:$0xff]
    %v1528 = vld [vmem:[#allocation6 + $0x230] sm:$0xf]
    %v1529 = vld [vmem:[#allocation6 + $0x234] sm:$0xff]
    %v1530 = vld [vmem:[#allocation6 + $0x23c] sm:$0xf]
    %v1531 = vld [vmem:[#allocation6 + $0x240] sm:$0xff]
    %v1532 = vld [vmem:[#allocation6 + $0x248] sm:$0xf]
    %v1533 = vld [vmem:[#allocation6 + $0x24c] sm:$0xff]
    %v1534 = vld [vmem:[#allocation6 + $0x254] sm:$0xf]
    %v1535 = vld [vmem:[#allocation6 + $0x258] sm:$0xff]
    %v1536 = vld [vmem:[#allocation6 + $0x260] sm:$0xf]
    %v1537 = vld [vmem:[#allocation6 + $0x264] sm:$0xff]
    %v1538 = vld [vmem:[#allocation6 + $0x26c] sm:$0xf]
    %v1539 = vld [vmem:[#allocation6 + $0x270] sm:$0xff]
    %v1540 = vld [vmem:[#allocation6 + $0x278] sm:$0xf]
    %v1541 = vld [vmem:[#allocation6 + $0x27c] sm:$0xff]
    %v1542 = vld [vmem:[#allocation6 + $0x284] sm:$0xf]
    %v1543 = vld [vmem:[#allocation6 + $0x288] sm:$0xff]
    %v1544 = vld [vmem:[#allocation6 + $0x290] sm:$0xf]
    %v1545 = vld [vmem:[#allocation6 + $0x294] sm:$0xff]
    %v1546 = vld [vmem:[#allocation6 + $0x29c] sm:$0xf]
    %v1547 = vld [vmem:[#allocation6 + $0x2a0] sm:$0xff]
    %v1548 = vld [vmem:[#allocation6 + $0x2a8] sm:$0xf]
    %v1549 = vld [vmem:[#allocation6 + $0x2ac] sm:$0xff]
    %v1550 = vld [vmem:[#allocation6 + $0x2b4] sm:$0xf]
    %v1551 = vld [vmem:[#allocation6 + $0x2b8] sm:$0xff]
    %v1552 = vld [vmem:[#allocation6 + $0x2c0] sm:$0xf]
    %v1553 = vld [vmem:[#allocation6 + $0x2c4] sm:$0xff]
    %v1554 = vld [vmem:[#allocation6 + $0x2cc] sm:$0xf]
    %v1555 = vld [vmem:[#allocation6 + $0x2d0] sm:$0xff]
    %v1556 = vld [vmem:[#allocation6 + $0x2d8] sm:$0xf]
    %v1557 = vld [vmem:[#allocation6 + $0x2dc] sm:$0xff]
    %v1558 = vld [vmem:[#allocation6 + $0x2e4] sm:$0xf]
    %v1559 = vld [vmem:[#allocation6 + $0x2e8] sm:$0xff]
    %v1560 = vld [vmem:[#allocation6 + $0x2f0] sm:$0xf]
    %v1561 = vld [vmem:[#allocation6 + $0x2f4] sm:$0xff]
    %v1562 = vld [vmem:[#allocation6 + $0x2fc] sm:$0xf]
    %v1691 = vunpack.c.l.b16 %v1435
    %v1692 = vunpack.c.h.b16 %v1435
    %v1693 = vunpack.c.l.b16 %v1436
    %v1694 = vunpack.c.l.b16 %v1437
    %v1695 = vunpack.c.h.b16 %v1437
    %v1696 = vunpack.c.l.b16 %v1438
    %v1697 = vunpack.c.l.b16 %v1439
    %v1698 = vunpack.c.h.b16 %v1439
    %v1699 = vunpack.c.l.b16 %v1440
    %v1700 = vunpack.c.l.b16 %v1441
    %v1701 = vunpack.c.h.b16 %v1441
    %v1702 = vunpack.c.l.b16 %v1442
    %v1703 = vunpack.c.l.b16 %v1443
    %v1704 = vunpack.c.h.b16 %v1443
    %v1705 = vunpack.c.l.b16 %v1444
    %v1706 = vunpack.c.l.b16 %v1445
    %v1707 = vunpack.c.h.b16 %v1445
    %v1708 = vunpack.c.l.b16 %v1446
    %v1709 = vunpack.c.l.b16 %v1447
    %v1710 = vunpack.c.h.b16 %v1447
    %v1711 = vunpack.c.l.b16 %v1448
    %v1712 = vunpack.c.l.b16 %v1449
    %v1713 = vunpack.c.h.b16 %v1449
    %v1714 = vunpack.c.l.b16 %v1450
    %v1715 = vunpack.c.l.b16 %v1451
    %v1716 = vunpack.c.h.b16 %v1451
    %v1717 = vunpack.c.l.b16 %v1452
    %v1718 = vunpack.c.l.b16 %v1453
    %v1719 = vunpack.c.h.b16 %v1453
    %v1720 = vunpack.c.l.b16 %v1454
    %v1721 = vunpack.c.l.b16 %v1455
    %v1722 = vunpack.c.h.b16 %v1455
    %v1723 = vunpack.c.l.b16 %v1456
    %v1724 = vunpack.c.l.b16 %v1457
    %v1725 = vunpack.c.h.b16 %v1457
    %v1726 = vunpack.c.l.b16 %v1458
    %v1727 = vunpack.c.l.b16 %v1459
    %v1728 = vunpack.c.h.b16 %v1459
    %v1729 = vunpack.c.l.b16 %v1460
    %v1730 = vunpack.c.l.b16 %v1461
    %v1731 = vunpack.c.h.b16 %v1461
    %v1732 = vunpack.c.l.b16 %v1462
    %v1733 = vunpack.c.l.b16 %v1463
    %v1734 = vunpack.c.h.b16 %v1463
    %v1735 = vunpack.c.l.b16 %v1464
    %v1736 = vunpack.c.l.b16 %v1465
    %v1737 = vunpack.c.h.b16 %v1465
    %v1738 = vunpack.c.l.b16 %v1466
    %v1739 = vunpack.c.l.b16 %v1467
    %v1740 = vunpack.c.h.b16 %v1467
    %v1741 = vunpack.c.l.b16 %v1468
    %v1742 = vunpack.c.l.b16 %v1469
    %v1743 = vunpack.c.h.b16 %v1469
    %v1744 = vunpack.c.l.b16 %v1470
    %v1745 = vunpack.c.l.b16 %v1471
    %v1746 = vunpack.c.h.b16 %v1471
    %v1747 = vunpack.c.l.b16 %v1472
    %v1748 = vunpack.c.l.b16 %v1473
    %v1749 = vunpack.c.h.b16 %v1473
    %v1750 = vunpack.c.l.b16 %v1474
    %v1751 = vunpack.c.l.b16 %v1475
    %v1752 = vunpack.c.h.b16 %v1475
    %v1753 = vunpack.c.l.b16 %v1476
    %v1754 = vunpack.c.l.b16 %v1477
    %v1755 = vunpack.c.h.b16 %v1477
    %v1756 = vunpack.c.l.b16 %v1478
    %v1757 = vunpack.c.l.b16 %v1479
    %v1758 = vunpack.c.h.b16 %v1479
    %v1759 = vunpack.c.l.b16 %v1480
    %v1760 = vunpack.c.l.b16 %v1481
    %v1761 = vunpack.c.h.b16 %v1481
    %v1762 = vunpack.c.l.b16 %v1482
    %v1763 = vunpack.c.l.b16 %v1483
    %v1764 = vunpack.c.h.b16 %v1483
    %v1765 = vunpack.c.l.b16 %v1484
    %v1766 = vunpack.c.l.b16 %v1485
    %v1767 = vunpack.c.h.b16 %v1485
    %v1768 = vunpack.c.l.b16 %v1486
    %v1769 = vunpack.c.l.b16 %v1487
    %v1770 = vunpack.c.h.b16 %v1487
    %v1771 = vunpack.c.l.b16 %v1488
    %v1772 = vunpack.c.l.b16 %v1489
    %v1773 = vunpack.c.h.b16 %v1489
    %v1774 = vunpack.c.l.b16 %v1490
    %v1775 = vunpack.c.l.b16 %v1491
    %v1776 = vunpack.c.h.b16 %v1491
    %v1777 = vunpack.c.l.b16 %v1492
    %v1778 = vunpack.c.l.b16 %v1493
    %v1779 = vunpack.c.h.b16 %v1493
    %v1780 = vunpack.c.l.b16 %v1494
    %v1781 = vunpack.c.l.b16 %v1495
    %v1782 = vunpack.c.h.b16 %v1495
    %v1783 = vunpack.c.l.b16 %v1496
    %v1784 = vunpack.c.l.b16 %v1497
    %v1785 = vunpack.c.h.b16 %v1497
    %v1786 = vunpack.c.l.b16 %v1498
    %v1787 = vunpack.c.l.b16 %v1499
    %v1788 = vunpack.c.h.b16 %v1499
    %v1789 = vunpack.c.l.b16 %v1500
    %v1790 = vunpack.c.l.b16 %v1501
    %v1791 = vunpack.c.h.b16 %v1501
    %v1792 = vunpack.c.l.b16 %v1502
    %v1793 = vunpack.c.l.b16 %v1503
    %v1794 = vunpack.c.h.b16 %v1503
    %v1795 = vunpack.c.l.b16 %v1504
    %v1796 = vunpack.c.l.b16 %v1505
    %v1797 = vunpack.c.h.b16 %v1505
    %v1798 = vunpack.c.l.b16 %v1506
    %v1799 = vunpack.c.l.b16 %v1507
    %v1800 = vunpack.c.h.b16 %v1507
    %v1801 = vunpack.c.l.b16 %v1508
    %v1802 = vunpack.c.l.b16 %v1509
    %v1803 = vunpack.c.h.b16 %v1509
    %v1804 = vunpack.c.l.b16 %v1510
    %v1805 = vunpack.c.l.b16 %v1511
    %v1806 = vunpack.c.h.b16 %v1511
    %v1807 = vunpack.c.l.b16 %v1512
    %v1808 = vunpack.c.l.b16 %v1513
    %v1809 = vunpack.c.h.b16 %v1513
    %v1810 = vunpack.c.l.b16 %v1514
    %v1811 = vunpack.c.l.b16 %v1515
    %v1812 = vunpack.c.h.b16 %v1515
    %v1813 = vunpack.c.l.b16 %v1516
    %v1814 = vunpack.c.l.b16 %v1517
    %v1815 = vunpack.c.h.b16 %v1517
    %v1816 = vunpack.c.l.b16 %v1518
    %v1817 = vunpack.c.l.b16 %v1519
    %v1818 = vunpack.c.h.b16 %v1519
    %v1819 = vunpack.c.l.b16 %v1520
    %v1820 = vunpack.c.l.b16 %v1521
    %v1821 = vunpack.c.h.b16 %v1521
    %v1822 = vunpack.c.l.b16 %v1522
    %v1823 = vunpack.c.l.b16 %v1523
    %v1824 = vunpack.c.h.b16 %v1523
    %v1825 = vunpack.c.l.b16 %v1524
    %v1826 = vunpack.c.l.b16 %v1525
    %v1827 = vunpack.c.h.b16 %v1525
    %v1828 = vunpack.c.l.b16 %v1526
    %v1829 = vunpack.c.l.b16 %v1527
    %v1830 = vunpack.c.h.b16 %v1527
    %v1831 = vunpack.c.l.b16 %v1528
    %v1832 = vunpack.c.l.b16 %v1529
    %v1833 = vunpack.c.h.b16 %v1529
    %v1834 = vunpack.c.l.b16 %v1530
    %v1835 = vunpack.c.l.b16 %v1531
    %v1836 = vunpack.c.h.b16 %v1531
    %v1837 = vunpack.c.l.b16 %v1532
    %v1838 = vunpack.c.l.b16 %v1533
    %v1839 = vunpack.c.h.b16 %v1533
    %v1840 = vunpack.c.l.b16 %v1534
    %v1841 = vunpack.c.l.b16 %v1535
    %v1842 = vunpack.c.h.b16 %v1535
    %v1843 = vunpack.c.l.b16 %v1536
    %v1844 = vunpack.c.l.b16 %v1537
    %v1845 = vunpack.c.h.b16 %v1537
    %v1846 = vunpack.c.l.b16 %v1538
    %v1847 = vunpack.c.l.b16 %v1539
    %v1848 = vunpack.c.h.b16 %v1539
    %v1849 = vunpack.c.l.b16 %v1540
    %v1850 = vunpack.c.l.b16 %v1541
    %v1851 = vunpack.c.h.b16 %v1541
    %v1852 = vunpack.c.l.b16 %v1542
    %v1853 = vunpack.c.l.b16 %v1543
    %v1854 = vunpack.c.h.b16 %v1543
    %v1855 = vunpack.c.l.b16 %v1544
    %v1856 = vunpack.c.l.b16 %v1545
    %v1857 = vunpack.c.h.b16 %v1545
    %v1858 = vunpack.c.l.b16 %v1546
    %v1859 = vunpack.c.l.b16 %v1547
    %v1860 = vunpack.c.h.b16 %v1547
    %v1861 = vunpack.c.l.b16 %v1548
    %v1862 = vunpack.c.l.b16 %v1549
    %v1863 = vunpack.c.h.b16 %v1549
    %v1864 = vunpack.c.l.b16 %v1550
    %v1865 = vunpack.c.l.b16 %v1551
    %v1866 = vunpack.c.h.b16 %v1551
    %v1867 = vunpack.c.l.b16 %v1552
    %v1868 = vunpack.c.l.b16 %v1553
    %v1869 = vunpack.c.h.b16 %v1553
    %v1870 = vunpack.c.l.b16 %v1554
    %v1871 = vunpack.c.l.b16 %v1555
    %v1872 = vunpack.c.h.b16 %v1555
    %v1873 = vunpack.c.l.b16 %v1556
    %v1874 = vunpack.c.l.b16 %v1557
    %v1875 = vunpack.c.h.b16 %v1557
    %v1876 = vunpack.c.l.b16 %v1558
    %v1877 = vunpack.c.l.b16 %v1559
    %v1878 = vunpack.c.h.b16 %v1559
    %v1879 = vunpack.c.l.b16 %v1560
    %v1880 = vunpack.c.l.b16 %v1561
    %v1881 = vunpack.c.h.b16 %v1561
    %v1882 = vunpack.c.l.b16 %v1562
    %v1883 = vpack.c.b16 %v1694, %v1691
    %v1884 = vpack.c.b16 %v1695, %v1692
    %v1885 = vpack.c.b16 %v1696, %v1693
    %v1886 = vpack.c.b16 %v1700, %v1697
    %v1887 = vpack.c.b16 %v1701, %v1698
    %v1888 = vpack.c.b16 %v1702, %v1699
    %v1889 = vpack.c.b16 %v1706, %v1703
    %v1890 = vpack.c.b16 %v1707, %v1704
    %v1891 = vpack.c.b16 %v1708, %v1705
    %v1892 = vpack.c.b16 %v1712, %v1709
    %v1893 = vpack.c.b16 %v1713, %v1710
    %v1894 = vpack.c.b16 %v1714, %v1711
    %v1895 = vpack.c.b16 %v1718, %v1715
    %v1896 = vpack.c.b16 %v1719, %v1716
    %v1897 = vpack.c.b16 %v1720, %v1717
    %v1898 = vpack.c.b16 %v1724, %v1721
    %v1899 = vpack.c.b16 %v1725, %v1722
    %v1900 = vpack.c.b16 %v1726, %v1723
    %v1901 = vpack.c.b16 %v1730, %v1727
    %v1902 = vpack.c.b16 %v1731, %v1728
    %v1903 = vpack.c.b16 %v1732, %v1729
    %v1904 = vpack.c.b16 %v1736, %v1733
    %v1905 = vpack.c.b16 %v1737, %v1734
    %v1906 = vpack.c.b16 %v1738, %v1735
    %v1907 = vpack.c.b16 %v1742, %v1739
    %v1908 = vpack.c.b16 %v1743, %v1740
    %v1909 = vpack.c.b16 %v1744, %v1741
    %v1910 = vpack.c.b16 %v1748, %v1745
    %v1911 = vpack.c.b16 %v1749, %v1746
    %v1912 = vpack.c.b16 %v1750, %v1747
    %v1913 = vpack.c.b16 %v1754, %v1751
    %v1914 = vpack.c.b16 %v1755, %v1752
    %v1915 = vpack.c.b16 %v1756, %v1753
    %v1916 = vpack.c.b16 %v1760, %v1757
    %v1917 = vpack.c.b16 %v1761, %v1758
    %v1918 = vpack.c.b16 %v1762, %v1759
    %v1919 = vpack.c.b16 %v1766, %v1763
    %v1920 = vpack.c.b16 %v1767, %v1764
    %v1921 = vpack.c.b16 %v1768, %v1765
    %v1922 = vpack.c.b16 %v1772, %v1769
    %v1923 = vpack.c.b16 %v1773, %v1770
    %v1924 = vpack.c.b16 %v1774, %v1771
    %v1925 = vpack.c.b16 %v1778, %v1775
    %v1926 = vpack.c.b16 %v1779, %v1776
    %v1927 = vpack.c.b16 %v1780, %v1777
    %v1928 = vpack.c.b16 %v1784, %v1781
    %v1929 = vpack.c.b16 %v1785, %v1782
    %v1930 = vpack.c.b16 %v1786, %v1783
    %v1931 = vpack.c.b16 %v1790, %v1787
    %v1932 = vpack.c.b16 %v1791, %v1788
    %v1933 = vpack.c.b16 %v1792, %v1789
    %v1934 = vpack.c.b16 %v1796, %v1793
    %v1935 = vpack.c.b16 %v1797, %v1794
    %v1936 = vpack.c.b16 %v1798, %v1795
    %v1937 = vpack.c.b16 %v1802, %v1799
    %v1938 = vpack.c.b16 %v1803, %v1800
    %v1939 = vpack.c.b16 %v1804, %v1801
    %v1940 = vpack.c.b16 %v1808, %v1805
    %v1941 = vpack.c.b16 %v1809, %v1806
    %v1942 = vpack.c.b16 %v1810, %v1807
    %v1943 = vpack.c.b16 %v1814, %v1811
    %v1944 = vpack.c.b16 %v1815, %v1812
    %v1945 = vpack.c.b16 %v1816, %v1813
    %v1946 = vpack.c.b16 %v1820, %v1817
    %v1947 = vpack.c.b16 %v1821, %v1818
    %v1948 = vpack.c.b16 %v1822, %v1819
    %v1949 = vpack.c.b16 %v1826, %v1823
    %v1950 = vpack.c.b16 %v1827, %v1824
    %v1951 = vpack.c.b16 %v1828, %v1825
    %v1952 = vpack.c.b16 %v1832, %v1829
    %v1953 = vpack.c.b16 %v1833, %v1830
    %v1954 = vpack.c.b16 %v1834, %v1831
    %v1955 = vpack.c.b16 %v1838, %v1835
    %v1956 = vpack.c.b16 %v1839, %v1836
    %v1957 = vpack.c.b16 %v1840, %v1837
    %v1958 = vpack.c.b16 %v1844, %v1841
    %v1959 = vpack.c.b16 %v1845, %v1842
    %v1960 = vpack.c.b16 %v1846, %v1843
    %v1961 = vpack.c.b16 %v1850, %v1847
    %v1962 = vpack.c.b16 %v1851, %v1848
    %v1963 = vpack.c.b16 %v1852, %v1849
    %v1964 = vpack.c.b16 %v1856, %v1853
    %v1965 = vpack.c.b16 %v1857, %v1854
    %v1966 = vpack.c.b16 %v1858, %v1855
    %v1967 = vpack.c.b16 %v1862, %v1859
    %v1968 = vpack.c.b16 %v1863, %v1860
    %v1969 = vpack.c.b16 %v1864, %v1861
    %v1970 = vpack.c.b16 %v1868, %v1865
    %v1971 = vpack.c.b16 %v1869, %v1866
    %v1972 = vpack.c.b16 %v1870, %v1867
    %v1973 = vpack.c.b16 %v1874, %v1871
    %v1974 = vpack.c.b16 %v1875, %v1872
    %v1975 = vpack.c.b16 %v1876, %v1873
    %v1976 = vpack.c.b16 %v1880, %v1877
    %v1977 = vpack.c.b16 %v1881, %v1878
    %v1978 = vpack.c.b16 %v1882, %v1879
    %2075 = vmatprep.subr.bf16.mxu0 %v1905
    %2076 = vmatpush1.bf16.msra.mxu0 %v1904
    %2077 = vmatprep.subr.bf16.mxu0 %v1902
    %2078 = vmatpush1.bf16.msra.mxu0 %v1901
    %2079 = vmatprep.subr.bf16.mxu0 %v1899
    %2080 = vmatpush1.bf16.msra.mxu0 %v1898
    %2081 = vmatprep.subr.bf16.mxu0 %v1896
    %2082 = vmatpush1.bf16.msra.mxu0 %v1895
    %2083 = vmatprep.subr.bf16.mxu0 %v1893
    %2084 = vmatpush1.bf16.msra.mxu0 %v1892
    %2085 = vmatprep.subr.bf16.mxu0 %v1890
    %2086 = vmatpush1.bf16.msra.mxu0 %v1889
    %2087 = vmatprep.subr.bf16.mxu0 %v1887
    %2088 = vmatpush1.bf16.msra.mxu0 %v1886
    %2089 = vmatprep.subr.bf16.mxu0 %v1884
    %2090 = vmatpush1.bf16.msra.mxu0 %v1883
    %2091 = vmatprep.subr.bf16.mxu0 %v1929
    %2092 = vmatpush2.bf16.msra.mxu0 %v1928
    %2093 = vmatprep.subr.bf16.mxu0 %v1926
    %2094 = vmatpush2.bf16.msra.mxu0 %v1925
    %2095 = vmatprep.subr.bf16.mxu0 %v1923
    %2096 = vmatpush2.bf16.msra.mxu0 %v1922
    %2097 = vmatprep.subr.bf16.mxu0 %v1920
    %2098 = vmatpush2.bf16.msra.mxu0 %v1919
    %2099 = vmatprep.subr.bf16.mxu0 %v1917
    %2100 = vmatpush2.bf16.msra.mxu0 %v1916
    %2101 = vmatprep.subr.bf16.mxu0 %v1914
    %2102 = vmatpush2.bf16.msra.mxu0 %v1913
    %2103 = vmatprep.subr.bf16.mxu0 %v1911
    %2104 = vmatpush2.bf16.msra.mxu0 %v1910
    %2105 = vmatprep.subr.bf16.mxu0 %v1908
    %2106 = vmatpush2.bf16.msra.mxu0 %v1907
    %2107 = vmatprep.mubr.bf16.mxu0 %v627
    %2108 = vmatmul.mubr.bf16.gmra.mxu0 %v626
    %v2109 = vpop.f32.mrf.mxu0
    %v2110 = vadd.f32 0.0, %v2109
    %v2111 = vpop.f32.mrf.mxu0
    %v2112 = vadd.f32 0.0, %v2111
    %v2113 = vpop.f32.mrf.mxu0
    %v2114 = vpop.f32.mrf.mxu0
    %2115 = vdwg.mxu0
    %2116 = vmatprep.subr.bf16.mxu0 %v1953
    %2117 = vmatpush1.bf16.msra.mxu0 %v1952
    %2118 = vmatprep.subr.bf16.mxu0 %v1950
    %2119 = vmatpush1.bf16.msra.mxu0 %v1949
    %2120 = vmatprep.subr.bf16.mxu0 %v1947
    %2121 = vmatpush1.bf16.msra.mxu0 %v1946
    %2122 = vmatprep.subr.bf16.mxu0 %v1944
    %2123 = vmatpush1.bf16.msra.mxu0 %v1943
    %2124 = vmatprep.subr.bf16.mxu0 %v1941
    %2125 = vmatpush1.bf16.msra.mxu0 %v1940
    %2126 = vmatprep.subr.bf16.mxu0 %v1938
    %2127 = vmatpush1.bf16.msra.mxu0 %v1937
    %2128 = vmatprep.subr.bf16.mxu0 %v1935
    %2129 = vmatpush1.bf16.msra.mxu0 %v1934
    %2130 = vmatprep.subr.bf16.mxu0 %v1932
    %2131 = vmatpush1.bf16.msra.mxu0 %v1931
    %2132 = vmatprep.subr.bf16.mxu0 %v1977
    %2133 = vmatpush2.bf16.msra.mxu0 %v1976
    %2134 = vmatprep.subr.bf16.mxu0 %v1974
    %2135 = vmatpush2.bf16.msra.mxu0 %v1973
    %2136 = vmatprep.subr.bf16.mxu0 %v1971
    %2137 = vmatpush2.bf16.msra.mxu0 %v1970
    %2138 = vmatprep.subr.bf16.mxu0 %v1968
    %2139 = vmatpush2.bf16.msra.mxu0 %v1967
    %2140 = vmatprep.subr.bf16.mxu0 %v1965
    %2141 = vmatpush2.bf16.msra.mxu0 %v1964
    %2142 = vmatprep.subr.bf16.mxu0 %v1962
    %2143 = vmatpush2.bf16.msra.mxu0 %v1961
    %2144 = vmatprep.subr.bf16.mxu0 %v1959
    %2145 = vmatpush2.bf16.msra.mxu0 %v1958
    %2146 = vmatprep.subr.bf16.mxu0 %v1956
    %2147 = vmatpush2.bf16.msra.mxu0 %v1955
    %2148 = vmatprep.mubr.bf16.mxu0 %v629
    %2149 = vmatmul.mubr.bf16.gmra.mxu0 %v628
    %v2150 = vpop.f32.mrf.mxu0
    %v2151 = vadd.f32 %v2110, %v2150
    %v2152 = vpop.f32.mrf.mxu0
    %v2153 = vadd.f32 %v2112, %v2152
    %v2154 = vpop.f32.mrf.mxu0
    %v2155 = vpop.f32.mrf.mxu0
    %2156 = vdwg.mxu0
    %2157 = vmatprep.subr.bf16.mxu0 0
    %2158 = vmatpush1.bf16.msra.mxu0 %v1906
    %2159 = vmatprep.subr.bf16.mxu0 0
    %2160 = vmatpush1.bf16.msra.mxu0 %v1903
    %2161 = vmatprep.subr.bf16.mxu0 0
    %2162 = vmatpush1.bf16.msra.mxu0 %v1900
    %2163 = vmatprep.subr.bf16.mxu0 0
    %2164 = vmatpush1.bf16.msra.mxu0 %v1897
    %2165 = vmatprep.subr.bf16.mxu0 0
    %2166 = vmatpush1.bf16.msra.mxu0 %v1894
    %2167 = vmatprep.subr.bf16.mxu0 0
    %2168 = vmatpush1.bf16.msra.mxu0 %v1891
    %2169 = vmatprep.subr.bf16.mxu0 0
    %2170 = vmatpush1.bf16.msra.mxu0 %v1888
    %2171 = vmatprep.subr.bf16.mxu0 0
    %2172 = vmatpush1.bf16.msra.mxu0 %v1885
    %2173 = vmatprep.subr.bf16.mxu0 0
    %2174 = vmatpush2.bf16.msra.mxu0 %v1930
    %2175 = vmatprep.subr.bf16.mxu0 0
    %2176 = vmatpush2.bf16.msra.mxu0 %v1927
    %2177 = vmatprep.subr.bf16.mxu0 0
    %2178 = vmatpush2.bf16.msra.mxu0 %v1924
    %2179 = vmatprep.subr.bf16.mxu0 0
    %2180 = vmatpush2.bf16.msra.mxu0 %v1921
    %2181 = vmatprep.subr.bf16.mxu0 0
    %2182 = vmatpush2.bf16.msra.mxu0 %v1918
    %2183 = vmatprep.subr.bf16.mxu0 0
    %2184 = vmatpush2.bf16.msra.mxu0 %v1915
    %2185 = vmatprep.subr.bf16.mxu0 0
    %2186 = vmatpush2.bf16.msra.mxu0 %v1912
    %2187 = vmatprep.subr.bf16.mxu0 0
    %2188 = vmatpush2.bf16.msra.mxu0 %v1909
    %2189 = vmatprep.mubr.bf16.mxu0 %v627
    %2190 = vmatmul.mubr.bf16.gmra.mxu0 %v626
    %v2191 = vpop.f32.mrf.mxu0
    %v2192 = vadd.f32 0.0, %v2191
    %v2193 = vpop.f32.mrf.mxu0
    %v2194 = vpop.f32.mrf.mxu0
    %v2195 = vpop.f32.mrf.mxu0
    %2196 = vdwg.mxu0
    %2197 = vmatprep.subr.bf16.mxu0 0
    %2198 = vmatpush1.bf16.msra.mxu0 %v1954
    %2199 = vmatprep.subr.bf16.mxu0 0
    %2200 = vmatpush1.bf16.msra.mxu0 %v1951
    %2201 = vmatprep.subr.bf16.mxu0 0
    %2202 = vmatpush1.bf16.msra.mxu0 %v1948
    %2203 = vmatprep.subr.bf16.mxu0 0
    %2204 = vmatpush1.bf16.msra.mxu0 %v1945
    %2205 = vmatprep.subr.bf16.mxu0 0
    %2206 = vmatpush1.bf16.msra.mxu0 %v1942
    %2207 = vmatprep.subr.bf16.mxu0 0
    %2208 = vmatpush1.bf16.msra.mxu0 %v1939
    %2209 = vmatprep.subr.bf16.mxu0 0
    %2210 = vmatpush1.bf16.msra.mxu0 %v1936
    %2211 = vmatprep.subr.bf16.mxu0 0
    %2212 = vmatpush1.bf16.msra.mxu0 %v1933
    %2213 = vmatprep.subr.bf16.mxu0 0
    %2214 = vmatpush2.bf16.msra.mxu0 %v1978
    %2215 = vmatprep.subr.bf16.mxu0 0
    %2216 = vmatpush2.bf16.msra.mxu0 %v1975
    %2217 = vmatprep.subr.bf16.mxu0 0
    %2218 = vmatpush2.bf16.msra.mxu0 %v1972
    %2219 = vmatprep.subr.bf16.mxu0 0
    %2220 = vmatpush2.bf16.msra.mxu0 %v1969
    %2221 = vmatprep.subr.bf16.mxu0 0
    %2222 = vmatpush2.bf16.msra.mxu0 %v1966
    %2223 = vmatprep.subr.bf16.mxu0 0
    %2224 = vmatpush2.bf16.msra.mxu0 %v1963
    %2225 = vmatprep.subr.bf16.mxu0 0
    %2226 = vmatpush2.bf16.msra.mxu0 %v1960
    %2227 = vmatprep.subr.bf16.mxu0 0
    %2228 = vmatpush2.bf16.msra.mxu0 %v1957
    %2229 = vmatprep.mubr.bf16.mxu0 %v629
    %2230 = vmatmul.mubr.bf16.gmra.mxu0 %v628
    %v2231 = vpop.f32.mrf.mxu0
    %v2232 = vadd.f32 %v2192, %v2231
    %v2233 = vpop.f32.mrf.mxu0
    %v2234 = vpop.f32.mrf.mxu0
    %v2235 = vpop.f32.mrf.mxu0
    %2236 = vdwg.mxu0
    %v2237 = vmax.f32 %v2151, 0.0
    %v2238 = vmax.f32 %v2153, 0.0
    %v2239 = vmax.f32 %v2232, 0.0
    %v2240 = vld [vmem:[%s4] sm:$0x7]
    %v2242 = vlaneseq
    %v2243 = vshrl.u32 %v2242, 7
    %v2244 = vsub.s32 0, %v2243
    %v2245 = vrot.slane %v2240, %v2244
    %v2246 = vlaneseq
    %v2247 = vshrl.u32 %v2246, 7
    %v2248 = vsub.s32 1, %v2247
    %v2249 = vrot.slane %v2240, %v2248
    %v2250 = vlaneseq
    %v2251 = vshrl.u32 %v2250, 7
    %v2252 = vsub.s32 2, %v2251
    %v2253 = vrot.slane %v2240, %v2252
    %v2257 = vmul.f32 %v1432, %v2245
    %v2258 = vmul.f32 %v1433, %v2249
    %v2259 = vmul.f32 %v1434, %v2253
    %v2260 = vadd.f32 %v2257, %v2258
    %v2261 = vadd.f32 %v2260, %v2259
    %2262 = vadd.xlane.f32.xlu0 %v2261
    %v2263 = vpop.xlane.xlu0 %2262
    %vm2264 = vcmask 7168
    %2265 = vst.msk [vmem:[%s6] sm:$0xff] %vm2264, %v2263
    %v2266 = vld [vmem:[%s5] sm:$0x7]
    %v2268 = vlaneseq
    %v2269 = vshrl.u32 %v2268, 7
    %v2270 = vsub.s32 0, %v2269
    %v2271 = vrot.slane %v2266, %v2270
    %v2272 = vlaneseq
    %v2273 = vshrl.u32 %v2272, 7
    %v2274 = vsub.s32 1, %v2273
    %v2275 = vrot.slane %v2266, %v2274
    %v2276 = vlaneseq
    %v2277 = vshrl.u32 %v2276, 7
    %v2278 = vsub.s32 2, %v2277
    %v2279 = vrot.slane %v2266, %v2278
    %v2283 = vmul.f32 %v2237, %v2271
    %v2284 = vmul.f32 %v2238, %v2275
    %v2285 = vmul.f32 %v2239, %v2279
    %v2286 = vadd.f32 %v2283, %v2284
    %v2287 = vadd.f32 %v2286, %v2285
    %2288 = vadd.xlane.f32.xlu0 %v2287
    %v2289 = vpop.xlane.xlu0 %2288
    %vm2290 = vcmask 15368
    %2291 = vst.msk [vmem:[%s6] sm:$0xff] %vm2290, %v2289
    // Predicated region
    $region38: #{critic_forward.1} parent=1 // pred_check
      _
    $region39: #{critic_forward.1} parent=1 // pred_check_branch
      %2293 = sbr.rel (0) target = $region41
    $region40: #{critic_forward.1} parent=1 // pred_region
      _
    $region41: #{critic_forward.1} parent=1 // pred_fallthru
      _
    // Predicated region
    $region42: #{critic_forward.1} parent=1 // pred_check
      _
    $region43: #{critic_forward.1} parent=1 // pred_check_branch
      %2295 = sbr.rel (0) target = $region45
    $region44: #{critic_forward.1} parent=1 // pred_region
      _
    $region45: #{critic_forward.1} parent=1 // pred_fallthru
      _
    %2296 = vsyncpa [#allocation3], 1
    %2297 = vsyncpa [#allocation5], 1

</llo_original>
